<compile_context>
chip_gen: v7x
topology: tpu7x:2x2x1
jax: 0.10.0
libtpu: 0.0.40
codegen_flags: <defaults>
</compile_context>

<pallas_src>
import math

import jax
import jax.numpy as jnp
from jax.experimental import pallas as pl
from jax.experimental.pallas import tpu as pltpu

# ---- model config (small, consistent with WhisperConfig shapes) ----
B = 2           # batch
S = 8           # sequence length
D = 32          # d_model (embed_dim)
H = 4           # encoder_attention_heads
HD = D // H     # head_dim
F = 64          # encoder_ffn_dim
LN_EPS = 1e-5
BS = B * S
BH = B * H


def _layer_norm(x, g, b):
    mu = jnp.mean(x, axis=-1, keepdims=True)
    var = jnp.mean((x - mu) * (x - mu), axis=-1, keepdims=True)
    return (x - mu) * jax.lax.rsqrt(var + LN_EPS) * g + b


def _erf(x):
    # Abramowitz & Stegun 7.1.26 (max abs err ~1.5e-7).  Uses only ops with
    # guaranteed Mosaic lowerings (abs / where / exp / poly) instead of lax.erf.
    a1, a2, a3, a4, a5 = (0.254829592, -0.284496736, 1.421413741,
                          -1.453152027, 1.061405429)
    p = 0.3275911
    ax = jnp.abs(x)
    t = 1.0 / (1.0 + p * ax)
    poly = ((((a5 * t + a4) * t + a3) * t + a2) * t + a1) * t
    y = 1.0 - poly * jnp.exp(-ax * ax)
    return jnp.where(x >= 0, y, -y)


def _gelu_exact(x):
    # HF "gelu" = exact erf GELU.
    return 0.5 * x * (1.0 + _erf(x * (1.0 / math.sqrt(2.0))))


def encoder_layer_kernel(
    x_ref, mask_ref, hm_ref,
    ln1_g_ref, ln1_b_ref,
    wqkv_ref, bqkv_ref,
    wo_ref, bo_ref,
    ln2_g_ref, ln2_b_ref,
    w1_ref, b1_ref, w2_ref, b2_ref,
    o_ref,
):
    x = x_ref[...]            # (B*S, D)
    mask4 = mask_ref[...]     # (B, 1, S, S) additive mask
    hm = hm_ref[...]          # (1, H, 1, D) per-head lane mask (packed at init)

    # ---- self_attn_layer_norm ----
    h = _layer_norm(x, ln1_g_ref[...], ln1_b_ref[...])

    # ---- fused QKV projection (q scale folded into weights; k bias packed as 0) ----
    qkv = jnp.dot(h, wqkv_ref[...], preferred_element_type=jnp.float32) + bqkv_ref[...]
    q = qkv[:, 0:D].reshape(B, S, D)
    k = qkv[:, D:2 * D].reshape(B, S, D)
    v = qkv[:, 2 * D:3 * D].reshape(B, S, D)

    # ---- stacked-head attention: one batched QK^T / softmax / PV chain ----
    # Heads live in disjoint lane groups of D: masking K (and V) per head
    # restricts each contraction to that head's lanes, and the per-head context
    # lands in disjoint lanes so a plain sum over heads reassembles (B, S, D).
    q4 = jnp.broadcast_to(q[:, None], (B, H, S, D)).reshape(BH, S, D)
    k4 = (k[:, None] * hm).reshape(BH, S, D)
    v4 = (v[:, None] * hm).reshape(BH, S, D)

    s = jnp.einsum("zqd,zkd->zqk", q4, k4,
                   preferred_element_type=jnp.float32).reshape(B, H, S, S)
    s = s + mask4                                   # broadcast over heads
    s = s - jnp.max(s, axis=-1, keepdims=True)
    p = jnp.exp(s)
    p = p * pl.reciprocal(jnp.sum(p, axis=-1, keepdims=True), approx=True)

    ctx4 = jnp.einsum("zqk,zkd->zqd", p.reshape(BH, S, S), v4,
                      preferred_element_type=jnp.float32).reshape(B, H, S, D)
    ctx = ctx4[:, 0]
    for hi in range(1, H):                          # heads occupy disjoint lanes
        ctx = ctx + ctx4[:, hi]

    attn_out = (jnp.dot(ctx.reshape(BS, D), wo_ref[...],
                        preferred_element_type=jnp.float32) + bo_ref[...])
    x1 = x + attn_out                               # residual (dropout = id, eval)

    # ---- final_layer_norm + MLP ----
    h2 = _layer_norm(x1, ln2_g_ref[...], ln2_b_ref[...])
    f = jnp.dot(h2, w1_ref[...], preferred_element_type=jnp.float32) + b1_ref[...]
    f = _gelu_exact(f)
    mlp_out = jnp.dot(f, w2_ref[...], preferred_element_type=jnp.float32) + b2_ref[...]

    # TODO(synk): lane-dense (BS*D/128, 128) slab store skipped at D=32 (the
    # minor-dim relayout reshape is a lowering risk); at real Whisper dims
    # D=1280 the output is already a multiple of 128 lanes and stores unmasked.
    o_ref[...] = x1 + mlp_out
    # TODO(synk): fp16 inf/nan clamp branch is a no-op for float32; skipped here.


def pack_params(params):
    """One-time packing: transpose nn.Linear weights, fuse QKV (k bias = 0),
    fold 1/sqrt(head_dim) into the Q columns, build the per-head lane mask,
    and make all biases 2-D (sublane-broadcastable)."""
    (ln1_g, ln1_b, wq, bq, wk, wv, bv, wo, bo,
     ln2_g, ln2_b, w1, b1, w2, b2) = params
    v2 = lambda a: a.reshape(1, -1)
    scale = 1.0 / math.sqrt(HD)
    wqkv = jnp.concatenate([wq.T * scale, wk.T, wv.T], axis=1)            # (D, 3D)
    bqkv = v2(jnp.concatenate([bq * scale, jnp.zeros_like(bq), bv]))      # (1, 3D)
    lane_head = jnp.arange(D, dtype=jnp.int32) // HD                      # (D,)
    hm = (lane_head[None, :] == jnp.arange(H, dtype=jnp.int32)[:, None])
    hm = hm.astype(jnp.float32).reshape(1, H, 1, D)                       # (1,H,1,D)
    return (hm,
            v2(ln1_g), v2(ln1_b),
            wqkv, bqkv,
            wo.T, v2(bo),
            v2(ln2_g), v2(ln2_b),
            w1.T, v2(b1), w2.T, v2(b2))


@jax.jit
def minicpm_whisper_encoder_layer(x, mask, packed):
    """x: (B, S, D) f32; mask: (B, S, S) f32 additive mask; packed = pack_params(...)."""
    b, s, d = x.shape
    out = pl.pallas_call(
        encoder_layer_kernel,
        out_shape=jax.ShapeDtypeStruct((b * s, d), jnp.float32),
        compiler_params=pltpu.CompilerParams(vmem_limit_bytes=32 * 1024 * 1024),
    )(x.reshape(b * s, d), mask.reshape(b, 1, s, s), *packed)
    return out.reshape(b, s, d)


def reference_layer(x, mask, params):
    (ln1_g, ln1_b, wq, bq, wk, wv, bv, wo, bo,
     ln2_g, ln2_b, w1, b1, w2, b2) = params

    def ln(v, g, b):
        mu = jnp.mean(v, -1, keepdims=True)
        var = jnp.mean((v - mu) ** 2, -1, keepdims=True)
        return (v - mu) / jnp.sqrt(var + LN_EPS) * g + b

    residual = x
    h = ln(x, ln1_g, ln1_b)
    q = h @ wq.T + bq
    k = h @ wk.T
    v = h @ wv.T + bv
    q = q.reshape(B, S, H, HD).transpose(0, 2, 1, 3) * (HD ** -0.5)
    k = k.reshape(B, S, H, HD).transpose(0, 2, 1, 3)
    v = v.reshape(B, S, H, HD).transpose(0, 2, 1, 3)
    sc = jnp.einsum("bhqd,bhkd->bhqk", q, k) + mask[:, None, :, :]
    p = jax.nn.softmax(sc, axis=-1)
    ctx = jnp.einsum("bhqk,bhkd->bhqd", p, v).transpose(0, 2, 1, 3).reshape(B, S, D)
    attn = ctx @ wo.T + bo
    x1 = residual + attn
    h2 = ln(x1, ln2_g, ln2_b)
    f = jax.nn.gelu(h2 @ w1.T + b1, approximate=False)
    return x1 + (f @ w2.T + b2)


if __name__ == "__main__":
    key = jax.random.PRNGKey(0)
    ks = jax.random.split(key, 20)
    sc = 0.05

    x = jax.random.normal(ks[0], (B, S, D), jnp.float32)
    # additive attention mask: mostly 0, a few large negatives
    mask = jnp.where(jax.random.uniform(ks[1], (B, S, S)) < 0.1, -1e9, 0.0).astype(jnp.float32)

    params = (
        jnp.ones((D,), jnp.float32),                                  # ln1 gamma
        jnp.zeros((D,), jnp.float32),                                 # ln1 beta
        sc * jax.random.normal(ks[2], (D, D), jnp.float32),           # wq (out, in)
        sc * jax.random.normal(ks[3], (D,), jnp.float32),             # bq
        sc * jax.random.normal(ks[4], (D, D), jnp.float32),           # wk (bias=False)
        sc * jax.random.normal(ks[5], (D, D), jnp.float32),           # wv
        sc * jax.random.normal(ks[6], (D,), jnp.float32),             # bv
        sc * jax.random.normal(ks[7], (D, D), jnp.float32),           # wo
        sc * jax.random.normal(ks[8], (D,), jnp.float32),             # bo
        jnp.ones((D,), jnp.float32),                                  # ln2 gamma
        jnp.zeros((D,), jnp.float32),                                 # ln2 beta
        sc * jax.random.normal(ks[9], (F, D), jnp.float32),           # fc1 weight (out, in)
        sc * jax.random.normal(ks[10], (F,), jnp.float32),            # fc1 bias
        sc * jax.random.normal(ks[11], (D, F), jnp.float32),          # fc2 weight
        sc * jax.random.normal(ks[12], (D,), jnp.float32),            # fc2 bias
    )

    packed = jax.tree_util.tree_map(jax.block_until_ready, pack_params(params))

    out = minicpm_whisper_encoder_layer(x, mask, packed)
    out = jax.block_until_ready(out)

    ref = reference_layer(x, mask, params)
    assert out.shape == (B, S, D)
    # tolerance covers the approximate (EUP) softmax reciprocal + poly erf
    assert jnp.allclose(out, ref, atol=5e-4, rtol=5e-4), float(jnp.max(jnp.abs(out - ref)))
    print("KERNEL_OK")
</pallas_src>

<mosaic_0001>
module attributes {stable_mosaic.version = 11 : i64} {
  func.func @encoder_layer_kernel(%arg0: memref<16x32xf32, #tpu.memory_space<vmem>>, %arg1: memref<2x1x8x8xf32, #tpu.memory_space<vmem>>, %arg2: memref<1x4x1x32xf32, #tpu.memory_space<vmem>>, %arg3: memref<1x32xf32, #tpu.memory_space<vmem>>, %arg4: memref<1x32xf32, #tpu.memory_space<vmem>>, %arg5: memref<32x96xf32, #tpu.memory_space<vmem>>, %arg6: memref<1x96xf32, #tpu.memory_space<vmem>>, %arg7: memref<32x32xf32, #tpu.memory_space<vmem>>, %arg8: memref<1x32xf32, #tpu.memory_space<vmem>>, %arg9: memref<1x32xf32, #tpu.memory_space<vmem>>, %arg10: memref<1x32xf32, #tpu.memory_space<vmem>>, %arg11: memref<32x64xf32, #tpu.memory_space<vmem>>, %arg12: memref<1x64xf32, #tpu.memory_space<vmem>>, %arg13: memref<64x32xf32, #tpu.memory_space<vmem>>, %arg14: memref<1x32xf32, #tpu.memory_space<vmem>>, %arg15: memref<16x32xf32, #tpu.memory_space<vmem>>) attributes {dimension_semantics = [], scalar_prefetch = 0 : i64, scratch_operands = 0 : i64, tpu.core_type = #tpu.core_type<tc>} {
    %c0 = arith.constant 0 : index
    %c0_0 = arith.constant 0 : index
    %0 = vector.load %arg0[%c0, %c0_0] : memref<16x32xf32, #tpu.memory_space<vmem>>, vector<16x32xf32>
    %c0_1 = arith.constant 0 : index
    %c0_2 = arith.constant 0 : index
    %c0_3 = arith.constant 0 : index
    %c0_4 = arith.constant 0 : index
    %1 = vector.load %arg1[%c0_1, %c0_2, %c0_3, %c0_4] : memref<2x1x8x8xf32, #tpu.memory_space<vmem>>, vector<2x1x8x8xf32>
    %c0_5 = arith.constant 0 : index
    %c0_6 = arith.constant 0 : index
    %c0_7 = arith.constant 0 : index
    %c0_8 = arith.constant 0 : index
    %2 = vector.load %arg2[%c0_5, %c0_6, %c0_7, %c0_8] : memref<1x4x1x32xf32, #tpu.memory_space<vmem>>, vector<1x4x1x32xf32>
    %c0_9 = arith.constant 0 : index
    %c0_10 = arith.constant 0 : index
    %3 = vector.load %arg3[%c0_9, %c0_10] : memref<1x32xf32, #tpu.memory_space<vmem>>, vector<1x32xf32>
    %c0_11 = arith.constant 0 : index
    %c0_12 = arith.constant 0 : index
    %4 = vector.load %arg4[%c0_11, %c0_12] : memref<1x32xf32, #tpu.memory_space<vmem>>, vector<1x32xf32>
    %cst = arith.constant dense<0.000000e+00> : vector<16xf32>
    %5 = vector.multi_reduction <add>, %0, %cst [1] : vector<16x32xf32> to vector<16xf32>
    %6 = vector.shape_cast %5 : vector<16xf32> to vector<16x1xf32>
    %cst_13 = arith.constant 3.200000e+01 : f32
    %7 = vector.broadcast %cst_13 : f32 to vector<16x1xf32>
    %8 = arith.divf %6, %7 : vector<16x1xf32>
    %9 = vector.broadcast %8 : vector<16x1xf32> to vector<16x32xf32>
    %10 = arith.subf %0, %9 : vector<16x32xf32>
    %11 = vector.broadcast %8 : vector<16x1xf32> to vector<16x32xf32>
    %12 = arith.subf %0, %11 : vector<16x32xf32>
    %13 = arith.mulf %10, %12 : vector<16x32xf32>
    %cst_14 = arith.constant dense<0.000000e+00> : vector<16xf32>
    %14 = vector.multi_reduction <add>, %13, %cst_14 [1] : vector<16x32xf32> to vector<16xf32>
    %15 = vector.shape_cast %14 : vector<16xf32> to vector<16x1xf32>
    %cst_15 = arith.constant 3.200000e+01 : f32
    %16 = vector.broadcast %cst_15 : f32 to vector<16x1xf32>
    %17 = arith.divf %15, %16 : vector<16x1xf32>
    %18 = vector.broadcast %8 : vector<16x1xf32> to vector<16x32xf32>
    %19 = arith.subf %0, %18 : vector<16x32xf32>
    %cst_16 = arith.constant 9.99999974E-6 : f32
    %20 = vector.broadcast %cst_16 : f32 to vector<16x1xf32>
    %21 = arith.addf %17, %20 : vector<16x1xf32>
    %22 = math.rsqrt %21 : vector<16x1xf32>
    %23 = vector.broadcast %22 : vector<16x1xf32> to vector<16x32xf32>
    %24 = arith.mulf %19, %23 : vector<16x32xf32>
    %25 = vector.broadcast %3 : vector<1x32xf32> to vector<16x32xf32>
    %26 = arith.mulf %24, %25 : vector<16x32xf32>
    %27 = vector.broadcast %4 : vector<1x32xf32> to vector<16x32xf32>
    %28 = arith.addf %26, %27 : vector<16x32xf32>
    %c0_17 = arith.constant 0 : index
    %c0_18 = arith.constant 0 : index
    %29 = vector.load %arg5[%c0_17, %c0_18] : memref<32x96xf32, #tpu.memory_space<vmem>>, vector<32x96xf32>
    %cst_19 = arith.constant dense<0.000000e+00> : vector<16x96xf32>
    %30 = tpu.matmul %28, %29, %cst_19 {dimension_numbers = #tpu.dot_dimension_numbers<[1], [0], [0], [1], [0, 0, 1, 1], [], []>} : vector<16x32xf32>, vector<32x96xf32>, vector<16x96xf32> -> vector<16x96xf32>
    %c0_20 = arith.constant 0 : index
    %c0_21 = arith.constant 0 : index
    %31 = vector.load %arg6[%c0_20, %c0_21] : memref<1x96xf32, #tpu.memory_space<vmem>>, vector<1x96xf32>
    %32 = vector.broadcast %31 : vector<1x96xf32> to vector<16x96xf32>
    %33 = arith.addf %30, %32 : vector<16x96xf32>
    %34 = vector.extract_strided_slice %33 {offsets = [0, 0], sizes = [16, 32], strides = [1, 1]} : vector<16x96xf32> to vector<16x32xf32>
    %35 = vector.shape_cast %34 : vector<16x32xf32> to vector<2x8x32xf32>
    %36 = vector.extract_strided_slice %33 {offsets = [0, 32], sizes = [16, 32], strides = [1, 1]} : vector<16x96xf32> to vector<16x32xf32>
    %37 = vector.shape_cast %36 : vector<16x32xf32> to vector<2x8x32xf32>
    %38 = vector.extract_strided_slice %33 {offsets = [0, 64], sizes = [16, 32], strides = [1, 1]} : vector<16x96xf32> to vector<16x32xf32>
    %39 = vector.shape_cast %38 : vector<16x32xf32> to vector<2x8x32xf32>
    %40 = vector.shape_cast %35 : vector<2x8x32xf32> to vector<2x1x8x32xf32>
    %41 = vector.shape_cast %40 : vector<2x1x8x32xf32> to vector<2x1x8x32xf32>
    %42 = vector.broadcast %41 : vector<2x1x8x32xf32> to vector<2x4x8x32xf32>
    %43 = vector.shape_cast %42 : vector<2x4x8x32xf32> to vector<8x8x32xf32>
    %44 = vector.shape_cast %37 : vector<2x8x32xf32> to vector<2x1x8x32xf32>
    %45 = vector.broadcast %44 : vector<2x1x8x32xf32> to vector<2x4x8x32xf32>
    %46 = vector.broadcast %2 : vector<1x4x1x32xf32> to vector<2x4x8x32xf32>
    %47 = arith.mulf %45, %46 : vector<2x4x8x32xf32>
    %48 = vector.shape_cast %47 : vector<2x4x8x32xf32> to vector<8x8x32xf32>
    %49 = vector.shape_cast %39 : vector<2x8x32xf32> to vector<2x1x8x32xf32>
    %50 = vector.broadcast %49 : vector<2x1x8x32xf32> to vector<2x4x8x32xf32>
    %51 = vector.broadcast %2 : vector<1x4x1x32xf32> to vector<2x4x8x32xf32>
    %52 = arith.mulf %50, %51 : vector<2x4x8x32xf32>
    %53 = vector.shape_cast %52 : vector<2x4x8x32xf32> to vector<8x8x32xf32>
    "tpu.trace_start"() <{level = 10 : i32, message = "zqd,zkd->zqk"}> : () -> ()
    %cst_22 = arith.constant dense<0.000000e+00> : vector<8x8x8xf32>
    %54 = tpu.matmul %43, %48, %cst_22 {dimension_numbers = #tpu.dot_dimension_numbers<[2], [2], [1], [1], [0, 0, 0, 1, 1, 1], [0], [0]>} : vector<8x8x32xf32>, vector<8x8x32xf32>, vector<8x8x8xf32> -> vector<8x8x8xf32>
    "tpu.trace_stop"() : () -> ()
    %55 = vector.shape_cast %54 : vector<8x8x8xf32> to vector<2x4x8x8xf32>
    %56 = vector.broadcast %1 : vector<2x1x8x8xf32> to vector<2x4x8x8xf32>
    %57 = arith.addf %55, %56 : vector<2x4x8x8xf32>
    %cst_23 = arith.constant dense<0xFF800000> : vector<2x4x8xf32>
    %58 = vector.multi_reduction <maximumf>, %57, %cst_23 [3] : vector<2x4x8x8xf32> to vector<2x4x8xf32>
    %59 = vector.shape_cast %58 : vector<2x4x8xf32> to vector<2x4x8x1xf32>
    %60 = vector.broadcast %59 : vector<2x4x8x1xf32> to vector<2x4x8x8xf32>
    %61 = arith.subf %57, %60 : vector<2x4x8x8xf32>
    %62 = math.exp %61 : vector<2x4x8x8xf32>
    %cst_24 = arith.constant dense<0.000000e+00> : vector<2x4x8xf32>
    %63 = vector.multi_reduction <add>, %62, %cst_24 [3] : vector<2x4x8x8xf32> to vector<2x4x8xf32>
    %64 = vector.shape_cast %63 : vector<2x4x8xf32> to vector<2x4x8x1xf32>
    %65 = tpu.reciprocal %64 {approx = true} : vector<2x4x8x1xf32> -> vector<2x4x8x1xf32>
    %66 = vector.broadcast %65 : vector<2x4x8x1xf32> to vector<2x4x8x8xf32>
    %67 = arith.mulf %62, %66 : vector<2x4x8x8xf32>
    %68 = vector.shape_cast %67 : vector<2x4x8x8xf32> to vector<8x8x8xf32>
    "tpu.trace_start"() <{level = 10 : i32, message = "zqk,zkd->zqd"}> : () -> ()
    %cst_25 = arith.constant dense<0.000000e+00> : vector<8x8x32xf32>
    %69 = tpu.matmul %68, %53, %cst_25 {dimension_numbers = #tpu.dot_dimension_numbers<[2], [1], [1], [2], [0, 0, 0, 1, 1, 2], [0], [0]>} : vector<8x8x8xf32>, vector<8x8x32xf32>, vector<8x8x32xf32> -> vector<8x8x32xf32>
    "tpu.trace_stop"() : () -> ()
    %70 = vector.shape_cast %69 : vector<8x8x32xf32> to vector<2x4x8x32xf32>
    %71 = vector.extract_strided_slice %70 {offsets = [0, 0, 0, 0], sizes = [2, 1, 8, 32], strides = [1, 1, 1, 1]} : vector<2x4x8x32xf32> to vector<2x1x8x32xf32>
    %72 = vector.shape_cast %71 : vector<2x1x8x32xf32> to vector<2x8x32xf32>
    %73 = vector.extract_strided_slice %70 {offsets = [0, 1, 0, 0], sizes = [2, 1, 8, 32], strides = [1, 1, 1, 1]} : vector<2x4x8x32xf32> to vector<2x1x8x32xf32>
    %74 = vector.shape_cast %73 : vector<2x1x8x32xf32> to vector<2x8x32xf32>
    %75 = arith.addf %72, %74 : vector<2x8x32xf32>
    %76 = vector.extract_strided_slice %70 {offsets = [0, 2, 0, 0], sizes = [2, 1, 8, 32], strides = [1, 1, 1, 1]} : vector<2x4x8x32xf32> to vector<2x1x8x32xf32>
    %77 = vector.shape_cast %76 : vector<2x1x8x32xf32> to vector<2x8x32xf32>
    %78 = arith.addf %75, %77 : vector<2x8x32xf32>
    %79 = vector.extract_strided_slice %70 {offsets = [0, 3, 0, 0], sizes = [2, 1, 8, 32], strides = [1, 1, 1, 1]} : vector<2x4x8x32xf32> to vector<2x1x8x32xf32>
    %80 = vector.shape_cast %79 : vector<2x1x8x32xf32> to vector<2x8x32xf32>
    %81 = arith.addf %78, %80 : vector<2x8x32xf32>
    %82 = vector.shape_cast %81 : vector<2x8x32xf32> to vector<16x32xf32>
    %c0_26 = arith.constant 0 : index
    %c0_27 = arith.constant 0 : index
    %83 = vector.load %arg7[%c0_26, %c0_27] : memref<32x32xf32, #tpu.memory_space<vmem>>, vector<32x32xf32>
    %cst_28 = arith.constant dense<0.000000e+00> : vector<16x32xf32>
    %84 = tpu.matmul %82, %83, %cst_28 {dimension_numbers = #tpu.dot_dimension_numbers<[1], [0], [0], [1], [0, 0, 1, 1], [], []>} : vector<16x32xf32>, vector<32x32xf32>, vector<16x32xf32> -> vector<16x32xf32>
    %c0_29 = arith.constant 0 : index
    %c0_30 = arith.constant 0 : index
    %85 = vector.load %arg8[%c0_29, %c0_30] : memref<1x32xf32, #tpu.memory_space<vmem>>, vector<1x32xf32>
    %86 = vector.broadcast %85 : vector<1x32xf32> to vector<16x32xf32>
    %87 = arith.addf %84, %86 : vector<16x32xf32>
    %88 = arith.addf %0, %87 : vector<16x32xf32>
    %c0_31 = arith.constant 0 : index
    %c0_32 = arith.constant 0 : index
    %89 = vector.load %arg9[%c0_31, %c0_32] : memref<1x32xf32, #tpu.memory_space<vmem>>, vector<1x32xf32>
    %c0_33 = arith.constant 0 : index
    %c0_34 = arith.constant 0 : index
    %90 = vector.load %arg10[%c0_33, %c0_34] : memref<1x32xf32, #tpu.memory_space<vmem>>, vector<1x32xf32>
    %cst_35 = arith.constant dense<0.000000e+00> : vector<16xf32>
    %91 = vector.multi_reduction <add>, %88, %cst_35 [1] : vector<16x32xf32> to vector<16xf32>
    %92 = vector.shape_cast %91 : vector<16xf32> to vector<16x1xf32>
    %cst_36 = arith.constant 3.200000e+01 : f32
    %93 = vector.broadcast %cst_36 : f32 to vector<16x1xf32>
    %94 = arith.divf %92, %93 : vector<16x1xf32>
    %95 = vector.broadcast %94 : vector<16x1xf32> to vector<16x32xf32>
    %96 = arith.subf %88, %95 : vector<16x32xf32>
    %97 = vector.broadcast %94 : vector<16x1xf32> to vector<16x32xf32>
    %98 = arith.subf %88, %97 : vector<16x32xf32>
    %99 = arith.mulf %96, %98 : vector<16x32xf32>
    %cst_37 = arith.constant dense<0.000000e+00> : vector<16xf32>
    %100 = vector.multi_reduction <add>, %99, %cst_37 [1] : vector<16x32xf32> to vector<16xf32>
    %101 = vector.shape_cast %100 : vector<16xf32> to vector<16x1xf32>
    %cst_38 = arith.constant 3.200000e+01 : f32
    %102 = vector.broadcast %cst_38 : f32 to vector<16x1xf32>
    %103 = arith.divf %101, %102 : vector<16x1xf32>
    %104 = vector.broadcast %94 : vector<16x1xf32> to vector<16x32xf32>
    %105 = arith.subf %88, %104 : vector<16x32xf32>
    %cst_39 = arith.constant 9.99999974E-6 : f32
    %106 = vector.broadcast %cst_39 : f32 to vector<16x1xf32>
    %107 = arith.addf %103, %106 : vector<16x1xf32>
    %108 = math.rsqrt %107 : vector<16x1xf32>
    %109 = vector.broadcast %108 : vector<16x1xf32> to vector<16x32xf32>
    %110 = arith.mulf %105, %109 : vector<16x32xf32>
    %111 = vector.broadcast %89 : vector<1x32xf32> to vector<16x32xf32>
    %112 = arith.mulf %110, %111 : vector<16x32xf32>
    %113 = vector.broadcast %90 : vector<1x32xf32> to vector<16x32xf32>
    %114 = arith.addf %112, %113 : vector<16x32xf32>
    %c0_40 = arith.constant 0 : index
    %c0_41 = arith.constant 0 : index
    %115 = vector.load %arg11[%c0_40, %c0_41] : memref<32x64xf32, #tpu.memory_space<vmem>>, vector<32x64xf32>
    %cst_42 = arith.constant dense<0.000000e+00> : vector<16x64xf32>
    %116 = tpu.matmul %114, %115, %cst_42 {dimension_numbers = #tpu.dot_dimension_numbers<[1], [0], [0], [1], [0, 0, 1, 1], [], []>} : vector<16x32xf32>, vector<32x64xf32>, vector<16x64xf32> -> vector<16x64xf32>
    %c0_43 = arith.constant 0 : index
    %c0_44 = arith.constant 0 : index
    %117 = vector.load %arg12[%c0_43, %c0_44] : memref<1x64xf32, #tpu.memory_space<vmem>>, vector<1x64xf32>
    %118 = vector.broadcast %117 : vector<1x64xf32> to vector<16x64xf32>
    %119 = arith.addf %116, %118 : vector<16x64xf32>
    %cst_45 = arith.constant 5.000000e-01 : f32
    %120 = vector.broadcast %cst_45 : f32 to vector<16x64xf32>
    %121 = arith.mulf %120, %119 : vector<16x64xf32>
    %cst_46 = arith.constant 0.707106769 : f32
    %122 = vector.broadcast %cst_46 : f32 to vector<16x64xf32>
    %123 = arith.mulf %119, %122 : vector<16x64xf32>
    %124 = math.absf %123 : vector<16x64xf32>
    %cst_47 = arith.constant 0.327591091 : f32
    %125 = vector.broadcast %cst_47 : f32 to vector<16x64xf32>
    %126 = arith.mulf %125, %124 : vector<16x64xf32>
    %cst_48 = arith.constant 1.000000e+00 : f32
    %127 = vector.broadcast %cst_48 : f32 to vector<16x64xf32>
    %128 = arith.addf %127, %126 : vector<16x64xf32>
    %cst_49 = arith.constant 1.000000e+00 : f32
    %129 = vector.broadcast %cst_49 : f32 to vector<16x64xf32>
    %130 = arith.divf %129, %128 : vector<16x64xf32>
    %cst_50 = arith.constant 1.06140542 : f32
    %131 = vector.broadcast %cst_50 : f32 to vector<16x64xf32>
    %132 = arith.mulf %131, %130 : vector<16x64xf32>
    %cst_51 = arith.constant -1.45315206 : f32
    %133 = vector.broadcast %cst_51 : f32 to vector<16x64xf32>
    %134 = arith.addf %132, %133 : vector<16x64xf32>
    %135 = arith.mulf %134, %130 : vector<16x64xf32>
    %cst_52 = arith.constant 1.42141378 : f32
    %136 = vector.broadcast %cst_52 : f32 to vector<16x64xf32>
    %137 = arith.addf %135, %136 : vector<16x64xf32>
    %138 = arith.mulf %137, %130 : vector<16x64xf32>
    %cst_53 = arith.constant -0.284496725 : f32
    %139 = vector.broadcast %cst_53 : f32 to vector<16x64xf32>
    %140 = arith.addf %138, %139 : vector<16x64xf32>
    %141 = arith.mulf %140, %130 : vector<16x64xf32>
    %cst_54 = arith.constant 0.254829586 : f32
    %142 = vector.broadcast %cst_54 : f32 to vector<16x64xf32>
    %143 = arith.addf %141, %142 : vector<16x64xf32>
    %144 = arith.mulf %143, %130 : vector<16x64xf32>
    %cst_55 = arith.constant 0.000000e+00 : f32
    %145 = vector.broadcast %cst_55 : f32 to vector<16x64xf32>
    %146 = arith.subf %145, %124 : vector<16x64xf32>
    %147 = arith.mulf %146, %124 : vector<16x64xf32>
    %148 = math.exp %147 : vector<16x64xf32>
    %149 = arith.mulf %144, %148 : vector<16x64xf32>
    %cst_56 = arith.constant 1.000000e+00 : f32
    %150 = vector.broadcast %cst_56 : f32 to vector<16x64xf32>
    %151 = arith.subf %150, %149 : vector<16x64xf32>
    %cst_57 = arith.constant 0.000000e+00 : f32
    %152 = vector.broadcast %cst_57 : f32 to vector<16x64xf32>
    %153 = arith.cmpf oge, %123, %152 : vector<16x64xf32>
    %cst_58 = arith.constant 0.000000e+00 : f32
    %154 = vector.broadcast %cst_58 : f32 to vector<16x64xf32>
    %155 = arith.subf %154, %151 : vector<16x64xf32>
    %156 = arith.select %153, %151, %155 : vector<16x64xi1>, vector<16x64xf32>
    %cst_59 = arith.constant 1.000000e+00 : f32
    %157 = vector.broadcast %cst_59 : f32 to vector<16x64xf32>
    %158 = arith.addf %157, %156 : vector<16x64xf32>
    %159 = arith.mulf %121, %158 : vector<16x64xf32>
    %c0_60 = arith.constant 0 : index
    %c0_61 = arith.constant 0 : index
    %160 = vector.load %arg13[%c0_60, %c0_61] : memref<64x32xf32, #tpu.memory_space<vmem>>, vector<64x32xf32>
    %cst_62 = arith.constant dense<0.000000e+00> : vector<16x32xf32>
    %161 = tpu.matmul %159, %160, %cst_62 {dimension_numbers = #tpu.dot_dimension_numbers<[1], [0], [0], [1], [0, 0, 1, 1], [], []>} : vector<16x64xf32>, vector<64x32xf32>, vector<16x32xf32> -> vector<16x32xf32>
    %c0_63 = arith.constant 0 : index
    %c0_64 = arith.constant 0 : index
    %162 = vector.load %arg14[%c0_63, %c0_64] : memref<1x32xf32, #tpu.memory_space<vmem>>, vector<1x32xf32>
    %163 = vector.broadcast %162 : vector<1x32xf32> to vector<16x32xf32>
    %164 = arith.addf %161, %163 : vector<16x32xf32>
    %165 = arith.addf %88, %164 : vector<16x32xf32>
    %c0_65 = arith.constant 0 : index
    %c0_66 = arith.constant 0 : index
    %166 = vector.load %arg15[%c0_65, %c0_66] : memref<16x32xf32, #tpu.memory_space<vmem>>, vector<16x32xf32>
    tpu.vector_store %arg15[%c0_65, %c0_66], %165 {strides = array<i32>} : memref<16x32xf32, #tpu.memory_space<vmem>>, vector<16x32xf32>,
    return
  }
}

</mosaic_0001>

<llo_original>
// kernel: minicpm_whisper_encoder_layer.1
$region0: #{minicpm_whisper_encoder_layer.1}
  #allocation0 [shape = 'u32[]', space=smem, size = 0x4, offset = 0x4, fixed_abs, tag = 'smem constant byte address 0x4 - core index']
  #allocation1 [shape = 'u32[144,128]{1,0:T(1,128)}', space=vmem, size = 0x12000, scoped, tag = 'internal scratch']
  %s0 = inlined_call_operand.hbm [shape: f32[16,32], index: 0, kind: input, shape index: {}]
  %s1 = inlined_call_operand.hbm [shape: f32[2,1,8,8], index: 1, kind: input, shape index: {}]
  %s2 = inlined_call_operand.vmem [shape: f32[1,4,1,32], index: 2, kind: input, shape index: {}]
  %s3 = inlined_call_operand.vmem [shape: f32[1,32], index: 3, kind: input, shape index: {}]
  %s4 = inlined_call_operand.vmem [shape: f32[1,32], index: 4, kind: input, shape index: {}]
  %s5 = inlined_call_operand.vmem [shape: f32[32,96], index: 5, kind: input, shape index: {}]
  %s6 = inlined_call_operand.vmem [shape: f32[1,96], index: 6, kind: input, shape index: {}]
  %s7 = inlined_call_operand.vmem [shape: f32[32,32], index: 7, kind: input, shape index: {}]
  %s8 = inlined_call_operand.vmem [shape: f32[1,32], index: 8, kind: input, shape index: {}]
  %s9 = inlined_call_operand.vmem [shape: f32[1,32], index: 9, kind: input, shape index: {}]
  %s10 = inlined_call_operand.vmem [shape: f32[1,32], index: 10, kind: input, shape index: {}]
  %s11 = inlined_call_operand.vmem [shape: f32[32,64], index: 11, kind: input, shape index: {}]
  %s12 = inlined_call_operand.vmem [shape: f32[1,64], index: 12, kind: input, shape index: {}]
  %s13 = inlined_call_operand.vmem [shape: f32[64,32], index: 13, kind: input, shape index: {}]
  %s14 = inlined_call_operand.vmem [shape: f32[1,32], index: 14, kind: input, shape index: {}]
  %s15 = inlined_call_operand.hbm [shape: f32[16,32], index: 15, kind: output, shape index: {}]
  %s16 = sld [smem:[#allocation0]]
  $region78: #{minicpm_whisper_encoder_layer.1} parent=0
    _
  %s18 = ssub.s32 1, %s16
  %s19 = scalar_select 0, %s18, %s16
  $region1: #{minicpm_whisper_encoder_layer.1} parent=0
    #allocation2 [shape = 'u8[8192]{0}', space=vmem, size = 0x2000, scoped, tag = 'input window, operand 0, single buffered']
    #allocation3 [shape = 's32[1]{0}', space=sflag, size = 0x4, scoped, tag = 'scoped memory for minicpm_whisper_encoder_layer.1']
    #allocation4 [shape = 's32[1]{0}', space=sflag, size = 0x4, scoped, tag = 'scoped memory for minicpm_whisper_encoder_layer.1']
    #allocation5 [shape = 'u8[8192]{0}', space=vmem, size = 0x2000, scoped, tag = 'input window, operand 1, single buffered']
    #allocation6 [shape = 's32[1]{0}', space=sflag, size = 0x4, scoped, tag = 'scoped memory for minicpm_whisper_encoder_layer.1']
    #allocation7 [shape = 'u8[8192]{0}', space=vmem, size = 0x2000, scoped, tag = 'output window, operand 0, single buffered']
    %20 = vsyncpa [#allocation3], 0
    %21 = vsyncpa [#allocation6], 0
    %22 = vsyncpa [#allocation4], 0
    // Predicated region
    $region2: #{minicpm_whisper_encoder_layer.1} parent=1 // pred_check
      _
    $region3: #{minicpm_whisper_encoder_layer.1} parent=1 // pred_check_branch
      %24 = sbr.rel (0) target = $region5
    $region4: #{minicpm_whisper_encoder_layer.1} parent=1 // pred_region
      %s26 = ssub.s32 256, 256
      %27 = vsyncadd [#allocation3], %s26
      %s28 = sshll.u32 [#allocation2], 4
      %s29 = int_to_ptr.vmem [resolvable:$true] %s28
      %34 = dma.hbm_to_vmem [thread:$0]  %s0, 256, %s29, [#allocation3], 128, 128, 8
    $region5: #{minicpm_whisper_encoder_layer.1} parent=1 // pred_fallthru
      _
    // Predicated region
    $region6: #{minicpm_whisper_encoder_layer.1} parent=1 // pred_check
      _
    $region7: #{minicpm_whisper_encoder_layer.1} parent=1 // pred_check_branch
      %36 = sbr.rel (0) target = $region9
    $region8: #{minicpm_whisper_encoder_layer.1} parent=1 // pred_region
      %s38 = ssub.s32 256, 256
      %39 = vsyncadd [#allocation6], %s38
      %s40 = sshll.u32 [#allocation5], 4
      %s41 = int_to_ptr.vmem [resolvable:$true] %s40
      %46 = dma.hbm_to_vmem [thread:$0]  %s1, 256, %s41, [#allocation6], 128, 128, 8
    $region9: #{minicpm_whisper_encoder_layer.1} parent=1 // pred_fallthru
      _
    // Predicated region
    $region10: #{minicpm_whisper_encoder_layer.1} parent=1 // pred_check
      _
    $region11: #{minicpm_whisper_encoder_layer.1} parent=1 // pred_check_branch
      %48 = sbr.rel (0) target = $region13
    $region12: #{minicpm_whisper_encoder_layer.1} parent=1 // pred_region
      _
    $region13: #{minicpm_whisper_encoder_layer.1} parent=1 // pred_fallthru
      _
    // Predicated region
    $region14: #{minicpm_whisper_encoder_layer.1} parent=1 // pred_check
      _
    $region15: #{minicpm_whisper_encoder_layer.1} parent=1 // pred_check_branch
      %50 = sbr.rel (0) target = $region17
    $region16: #{minicpm_whisper_encoder_layer.1} parent=1 // pred_region
      _
    $region17: #{minicpm_whisper_encoder_layer.1} parent=1 // pred_fallthru
      _
    // Predicated region
    $region18: #{minicpm_whisper_encoder_layer.1} parent=1 // pred_check
      _
    $region19: #{minicpm_whisper_encoder_layer.1} parent=1 // pred_check_branch
      %52 = sbr.rel (0) target = $region21
    $region20: #{minicpm_whisper_encoder_layer.1} parent=1 // pred_region
      _
    $region21: #{minicpm_whisper_encoder_layer.1} parent=1 // pred_fallthru
      _
    // Predicated region
    $region22: #{minicpm_whisper_encoder_layer.1} parent=1 // pred_check
      _
    $region23: #{minicpm_whisper_encoder_layer.1} parent=1 // pred_check_branch
      %54 = sbr.rel (0) target = $region25
    $region24: #{minicpm_whisper_encoder_layer.1} parent=1 // pred_region
      _
    $region25: #{minicpm_whisper_encoder_layer.1} parent=1 // pred_fallthru
      _
    // Predicated region
    $region26: #{minicpm_whisper_encoder_layer.1} parent=1 // pred_check
      _
    $region27: #{minicpm_whisper_encoder_layer.1} parent=1 // pred_check_branch
      %56 = sbr.rel (0) target = $region29
    $region28: #{minicpm_whisper_encoder_layer.1} parent=1 // pred_region
      _
    $region29: #{minicpm_whisper_encoder_layer.1} parent=1 // pred_fallthru
      _
    // Predicated region
    $region30: #{minicpm_whisper_encoder_layer.1} parent=1 // pred_check
      _
    $region31: #{minicpm_whisper_encoder_layer.1} parent=1 // pred_check_branch
      %58 = sbr.rel (0) target = $region33
    $region32: #{minicpm_whisper_encoder_layer.1} parent=1 // pred_region
      _
    $region33: #{minicpm_whisper_encoder_layer.1} parent=1 // pred_fallthru
      _
    // Predicated region
    $region34: #{minicpm_whisper_encoder_layer.1} parent=1 // pred_check
      _
    $region35: #{minicpm_whisper_encoder_layer.1} parent=1 // pred_check_branch
      %60 = sbr.rel (0) target = $region37
    $region36: #{minicpm_whisper_encoder_layer.1} parent=1 // pred_region
      _
    $region37: #{minicpm_whisper_encoder_layer.1} parent=1 // pred_fallthru
      _
    // Predicated region
    $region38: #{minicpm_whisper_encoder_layer.1} parent=1 // pred_check
      _
    $region39: #{minicpm_whisper_encoder_layer.1} parent=1 // pred_check_branch
      %62 = sbr.rel (0) target = $region41
    $region40: #{minicpm_whisper_encoder_layer.1} parent=1 // pred_region
      _
    $region41: #{minicpm_whisper_encoder_layer.1} parent=1 // pred_fallthru
      _
    // Predicated region
    $region42: #{minicpm_whisper_encoder_layer.1} parent=1 // pred_check
      _
    $region43: #{minicpm_whisper_encoder_layer.1} parent=1 // pred_check_branch
      %64 = sbr.rel (0) target = $region45
    $region44: #{minicpm_whisper_encoder_layer.1} parent=1 // pred_region
      _
    $region45: #{minicpm_whisper_encoder_layer.1} parent=1 // pred_fallthru
      _
    // Predicated region
    $region46: #{minicpm_whisper_encoder_layer.1} parent=1 // pred_check
      _
    $region47: #{minicpm_whisper_encoder_layer.1} parent=1 // pred_check_branch
      %66 = sbr.rel (0) target = $region49
    $region48: #{minicpm_whisper_encoder_layer.1} parent=1 // pred_region
      _
    $region49: #{minicpm_whisper_encoder_layer.1} parent=1 // pred_fallthru
      _
    // Predicated region
    $region50: #{minicpm_whisper_encoder_layer.1} parent=1 // pred_check
      _
    $region51: #{minicpm_whisper_encoder_layer.1} parent=1 // pred_check_branch
      %68 = sbr.rel (0) target = $region53
    $region52: #{minicpm_whisper_encoder_layer.1} parent=1 // pred_region
      _
    $region53: #{minicpm_whisper_encoder_layer.1} parent=1 // pred_fallthru
      _
    // Predicated region
    $region54: #{minicpm_whisper_encoder_layer.1} parent=1 // pred_check
      _
    $region55: #{minicpm_whisper_encoder_layer.1} parent=1 // pred_check_branch
      %70 = sbr.rel (0) target = $region57
    $region56: #{minicpm_whisper_encoder_layer.1} parent=1 // pred_region
      _
    $region57: #{minicpm_whisper_encoder_layer.1} parent=1 // pred_fallthru
      _
    // Predicated region
    $region58: #{minicpm_whisper_encoder_layer.1} parent=1 // pred_check
      _
    $region59: #{minicpm_whisper_encoder_layer.1} parent=1 // pred_check_branch
      %72 = sbr.rel (0) target = $region61
    $region60: #{minicpm_whisper_encoder_layer.1} parent=1 // pred_region
      _
    $region61: #{minicpm_whisper_encoder_layer.1} parent=1 // pred_fallthru
      _
    // Predicated region
    $region62: #{minicpm_whisper_encoder_layer.1} parent=1 // pred_check
      _
    $region63: #{minicpm_whisper_encoder_layer.1} parent=1 // pred_check_branch
      %74 = sbr.rel (0) target = $region65
    $region64: #{minicpm_whisper_encoder_layer.1} parent=1 // pred_region
      %75 = dma.done [#allocation3], 256
    $region65: #{minicpm_whisper_encoder_layer.1} parent=1 // pred_fallthru
      _
    // Predicated region
    $region66: #{minicpm_whisper_encoder_layer.1} parent=1 // pred_check
      _
    $region67: #{minicpm_whisper_encoder_layer.1} parent=1 // pred_check_branch
      %77 = sbr.rel (0) target = $region69
    $region68: #{minicpm_whisper_encoder_layer.1} parent=1 // pred_region
      %78 = dma.done [#allocation6], 256
    $region69: #{minicpm_whisper_encoder_layer.1} parent=1 // pred_fallthru
      _
    %v79 = vld [vmem:[#allocation2] sm:$0xff]
    %v80 = vld [vmem:[#allocation2 + $0x8] sm:$0xff]
    %v81 = vld [vmem:[#allocation5] sm:$0xff]
    %v82 = vld [vmem:[#allocation5 + $0x8] sm:$0xff]
    %v83 = vld [vmem:[%s2] sm:$0x1]
    %v84 = vld [vmem:[%s2 + $0x1] sm:$0x1]
    %v85 = vld [vmem:[%s2 + $0x2] sm:$0x1]
    %v86 = vld [vmem:[%s2 + $0x3] sm:$0x1]
    %v87 = vld [vmem:[%s3] sm:$0x1]
    %v88 = vld [vmem:[%s4] sm:$0x1]
    %vm89 = vcmask 261120
    %v90 = vsel %vm89, %v79, 0.0
    %91 = vadd.xlane.f32.xlu0 %v90
    %v92 = vpop.xlane.xlu0 %91
    %v93 = vsel %vm89, %v80, 0.0
    %94 = vadd.xlane.f32.xlu0 %v93
    %v95 = vpop.xlane.xlu0 %94
    %v96 = vrcp.pop 32.0
    %v97 = vmul.f32 %v92, %v96
    %v98 = vmul.f32 %v95, %v96
    %v99 = vsub.f32 %v79, %v97
    %v100 = vsub.f32 %v80, %v98
    %v101 = vmul.f32 %v99, %v99
    %v102 = vmul.f32 %v100, %v100
    %v103 = vsel %vm89, %v101, 0.0
    %104 = vadd.xlane.f32.xlu0 %v103
    %v105 = vpop.xlane.xlu0 %104
    %v106 = vsel %vm89, %v102, 0.0
    %107 = vadd.xlane.f32.xlu0 %v106
    %v108 = vpop.xlane.xlu0 %107
    %v109 = vmul.f32 %v105, %v96
    %v110 = vmul.f32 %v108, %v96
    %v111 = vadd.f32 %v109, 1e-05
    %v112 = vadd.f32 %v110, 1e-05
    %v113 = vrsqrt.pop %v111
    %v114 = vrsqrt.pop %v112
    %v115 = vmul.f32 %v99, %v113
    %v116 = vmul.f32 %v100, %v114
    %v118 = vlaneseq
    %v119 = vshrl.u32 %v118, 7
    %v120 = vsub.s32 0, %v119
    %v121 = vrot.slane %v87, %v120
    %v123 = vmul.f32 %v115, %v121
    %v124 = vmul.f32 %v116, %v121
    %v126 = vlaneseq
    %v127 = vshrl.u32 %v126, 7
    %v128 = vsub.s32 0, %v127
    %v129 = vrot.slane %v88, %v128
    %v131 = vadd.f32 %v123, %v129
    %v132 = vadd.f32 %v124, %v129
    %v133 = vld [vmem:[%s5] sm:$0xff]
    %v134 = vld [vmem:[%s5 + $0x8] sm:$0xff]
    %v135 = vld [vmem:[%s5 + $0x10] sm:$0xff]
    %v136 = vld [vmem:[%s5 + $0x18] sm:$0xff]
    %v137 = vld [vmem:[%s6] sm:$0x1]
    %v139 = vlaneseq
    %v140 = vshrl.u32 %v139, 7
    %v141 = vsub.s32 0, %v140
    %v142 = vrot.slane %v137, %v141
    %v145 = vsel %vm89, %v131, 0
    %v148 = vsel %vm89, %v132, 0
    %150 = vmatprep.subr.mxu0 0.0
    %151 = vmatpush1.msra.mxu0 %v133
    %152 = vmatprep.subr.mxu0 0.0
    %153 = vmatpush1.msra.mxu0 %v134
    %154 = vmatprep.subr.mxu0 0.0
    %155 = vmatpush1.msra.mxu0 %v135
    %156 = vmatprep.subr.mxu0 0.0
    %157 = vmatpush1.msra.mxu0 %v136
    %158 = vmatprep.subr.mxu0 0.0
    %159 = vmatpush1.msra.mxu0 0.0
    %160 = vmatprep.subr.mxu0 0.0
    %161 = vmatpush1.msra.mxu0 0.0
    %162 = vmatprep.subr.mxu0 0.0
    %163 = vmatpush1.msra.mxu0 0.0
    %164 = vmatprep.subr.mxu0 0.0
    %165 = vmatpush1.msra.mxu0 0.0
    %166 = vmatprep.subr.mxu0 0.0
    %167 = vmatpush1.msra.mxu0 0.0
    %168 = vmatprep.subr.mxu0 0.0
    %169 = vmatpush1.msra.mxu0 0.0
    %170 = vmatprep.subr.mxu0 0.0
    %171 = vmatpush1.msra.mxu0 0.0
    %172 = vmatprep.subr.mxu0 0.0
    %173 = vmatpush1.msra.mxu0 0.0
    %174 = vmatprep.subr.mxu0 0.0
    %175 = vmatpush1.msra.mxu0 0.0
    %176 = vmatprep.subr.mxu0 0.0
    %177 = vmatpush1.msra.mxu0 0.0
    %178 = vmatprep.subr.mxu0 0.0
    %179 = vmatpush1.msra.mxu0 0.0
    %180 = vmatprep.subr.mxu0 0.0
    %181 = vmatpush1.msra.mxu0 0.0
    %182 = vmatprep.subr.mxu0 0.0
    %183 = vmatpush1.msra.mxu0 0.0
    %184 = vmatprep.subr.mxu0 0.0
    %185 = vmatpush1.msra.mxu0 0.0
    %186 = vmatprep.subr.mxu0 0.0
    %187 = vmatpush1.msra.mxu0 0.0
    %188 = vmatprep.subr.mxu0 0.0
    %189 = vmatpush1.msra.mxu0 0.0
    %190 = vmatprep.subr.mxu0 0.0
    %191 = vmatpush1.msra.mxu0 0.0
    %192 = vmatprep.subr.mxu0 0.0
    %193 = vmatpush1.msra.mxu0 0.0
    %194 = vmatprep.subr.mxu0 0.0
    %195 = vmatpush1.msra.mxu0 0.0
    %196 = vmatprep.subr.mxu0 0.0
    %197 = vmatpush1.msra.mxu0 0.0
    %198 = vmatprep.subr.mxu0 0.0
    %199 = vmatpush1.msra.mxu0 0.0
    %200 = vmatprep.subr.mxu0 0.0
    %201 = vmatpush1.msra.mxu0 0.0
    %202 = vmatprep.subr.mxu0 0.0
    %203 = vmatpush1.msra.mxu0 0.0
    %204 = vmatprep.subr.mxu0 0.0
    %205 = vmatpush1.msra.mxu0 0.0
    %206 = vmatprep.subr.mxu0 0.0
    %207 = vmatpush1.msra.mxu0 0.0
    %208 = vmatprep.subr.mxu0 0.0
    %209 = vmatpush1.msra.mxu0 0.0
    %210 = vmatprep.subr.mxu0 0.0
    %211 = vmatpush1.msra.mxu0 0.0
    %212 = vmatprep.subr.mxu0 0.0
    %213 = vmatpush1.msra.mxu0 0.0
    %214 = vmatprep.mubr.f32.mxu0 0.0
    %215 = vmatmul.mubr.f32.gmra.mrb[0].mxu0 %v145
    %v216 = vpop.f32.mrb[0].mxu0
    %v217 = vadd.f32 %v142, %v216
    %v218 = vpop.f32.mrb[0].mxu0
    %219 = vmatprep.mubr.f32.mxu0 0.0
    %220 = vmatmul.mubr.f32.gmra.mrb[0].mxu0 %v148
    %v221 = vpop.f32.mrb[0].mxu0
    %v222 = vadd.f32 %v142, %v221
    %v223 = vpop.f32.mrb[0].mxu0
    %224 = vdwg.mxu0
    %v229 = vlaneseq
    %v230 = vshrl.u32 %v229, 7
    %v231 = vsub.s32 0, %v230
    %v232 = vrot.slane %v83, %v231
    %v233 = vlaneseq
    %v234 = vshrl.u32 %v233, 7
    %v235 = vsub.s32 0, %v234
    %v236 = vrot.slane %v84, %v235
    %v237 = vlaneseq
    %v238 = vshrl.u32 %v237, 7
    %v239 = vsub.s32 0, %v238
    %v240 = vrot.slane %v85, %v239
    %v241 = vlaneseq
    %v242 = vshrl.u32 %v241, 7
    %v243 = vsub.s32 0, %v242
    %v244 = vrot.slane %v86, %v243
    %245 = vrot.lane.b32.xlu0 %v232, 32
    %v246 = vpop.permute.xlu0 %245
    %247 = vrot.lane.b32.xlu0 %v236, 32
    %v248 = vpop.permute.xlu0 %247
    %249 = vrot.lane.b32.xlu0 %v240, 32
    %v250 = vpop.permute.xlu0 %249
    %251 = vrot.lane.b32.xlu0 %v244, 32
    %v252 = vpop.permute.xlu0 %251
    %v257 = vmul.f32 %v217, %v246
    %v258 = vmul.f32 %v217, %v248
    %v259 = vmul.f32 %v217, %v250
    %v260 = vmul.f32 %v217, %v252
    %v261 = vmul.f32 %v222, %v246
    %v262 = vmul.f32 %v222, %v248
    %v263 = vmul.f32 %v222, %v250
    %v264 = vmul.f32 %v222, %v252
    %265 = vrot.lane.b32.xlu0 %v232, 64
    %v266 = vpop.permute.xlu0 %265
    %267 = vrot.lane.b32.xlu0 %v236, 64
    %v268 = vpop.permute.xlu0 %267
    %269 = vrot.lane.b32.xlu0 %v240, 64
    %v270 = vpop.permute.xlu0 %269
    %271 = vrot.lane.b32.xlu0 %v244, 64
    %v272 = vpop.permute.xlu0 %271
    %v277 = vmul.f32 %v217, %v266
    %v278 = vmul.f32 %v217, %v268
    %v279 = vmul.f32 %v217, %v270
    %v280 = vmul.f32 %v217, %v272
    %v281 = vmul.f32 %v222, %v266
    %v282 = vmul.f32 %v222, %v268
    %v283 = vmul.f32 %v222, %v270
    %v284 = vmul.f32 %v222, %v272
    %286 = vrot.lane.b32.xlu0 %v257, 96
    %v287 = vpop.permute.xlu0 %286
    %v289 = vsel %vm89, %v217, 0
    %v291 = vsel %vm89, %v287, 0
    %293 = vmatprep.subr.mxu0 0.0
    %294 = vmatpush1.xpose.msra.mxu0 %v291
    %295 = vmatprep.subr.mxu0 0.0
    %296 = vmatpush1.xpose.msra.mxu0 0.0
    %297 = vmatprep.subr.mxu0 0.0
    %298 = vmatpush1.xpose.msra.mxu0 0.0
    %299 = vmatprep.subr.mxu0 0.0
    %300 = vmatpush1.xpose.msra.mxu0 0.0
    %301 = vmatprep.subr.mxu0 0.0
    %302 = vmatpush1.xpose.msra.mxu0 0.0
    %303 = vmatprep.subr.mxu0 0.0
    %304 = vmatpush1.xpose.msra.mxu0 0.0
    %305 = vmatprep.subr.mxu0 0.0
    %306 = vmatpush1.xpose.msra.mxu0 0.0
    %307 = vmatprep.subr.mxu0 0.0
    %308 = vmatpush1.xpose.msra.mxu0 0.0
    %309 = vmatprep.subr.mxu0 0.0
    %310 = vmatpush1.xpose.msra.mxu0 0.0
    %311 = vmatprep.subr.mxu0 0.0
    %312 = vmatpush1.xpose.msra.mxu0 0.0
    %313 = vmatprep.subr.mxu0 0.0
    %314 = vmatpush1.xpose.msra.mxu0 0.0
    %315 = vmatprep.subr.mxu0 0.0
    %316 = vmatpush1.xpose.msra.mxu0 0.0
    %317 = vmatprep.subr.mxu0 0.0
    %318 = vmatpush1.xpose.msra.mxu0 0.0
    %319 = vmatprep.subr.mxu0 0.0
    %320 = vmatpush1.xpose.msra.mxu0 0.0
    %321 = vmatprep.subr.mxu0 0.0
    %322 = vmatpush1.xpose.msra.mxu0 0.0
    %323 = vmatprep.subr.mxu0 0.0
    %324 = vmatpush1.xpose.msra.mxu0 0.0
    %325 = vmatprep.subr.mxu0 0.0
    %326 = vmatpush1.xpose.msra.mxu0 0.0
    %327 = vmatprep.subr.mxu0 0.0
    %328 = vmatpush1.xpose.msra.mxu0 0.0
    %329 = vmatprep.subr.mxu0 0.0
    %330 = vmatpush1.xpose.msra.mxu0 0.0
    %331 = vmatprep.subr.mxu0 0.0
    %332 = vmatpush1.xpose.msra.mxu0 0.0
    %333 = vmatprep.subr.mxu0 0.0
    %334 = vmatpush1.xpose.msra.mxu0 0.0
    %335 = vmatprep.subr.mxu0 0.0
    %336 = vmatpush1.xpose.msra.mxu0 0.0
    %337 = vmatprep.subr.mxu0 0.0
    %338 = vmatpush1.xpose.msra.mxu0 0.0
    %339 = vmatprep.subr.mxu0 0.0
    %340 = vmatpush1.xpose.msra.mxu0 0.0
    %341 = vmatprep.subr.mxu0 0.0
    %342 = vmatpush1.xpose.msra.mxu0 0.0
    %343 = vmatprep.subr.mxu0 0.0
    %344 = vmatpush1.xpose.msra.mxu0 0.0
    %345 = vmatprep.subr.mxu0 0.0
    %346 = vmatpush1.xpose.msra.mxu0 0.0
    %347 = vmatprep.subr.mxu0 0.0
    %348 = vmatpush1.xpose.msra.mxu0 0.0
    %349 = vmatprep.subr.mxu0 0.0
    %350 = vmatpush1.xpose.msra.mxu0 0.0
    %351 = vmatprep.subr.mxu0 0.0
    %352 = vmatpush1.xpose.msra.mxu0 0.0
    %353 = vmatprep.subr.mxu0 0.0
    %354 = vmatpush1.xpose.msra.mxu0 0.0
    %355 = vmatprep.subr.mxu0 0.0
    %356 = vmatpush1.xpose.msra.mxu0 0.0
    %357 = vmatprep.mubr.f32.mxu0 0.0
    %358 = vmatmul.mubr.f32.gmra.mrb[0].mxu0 %v289
    %v359 = vpop.f32.mrb[0].mxu0
    %v360 = vadd.f32 0.0, %v359
    %v361 = vpop.f32.mrb[0].mxu0
    %362 = vdwg.mxu0
    %364 = vrot.lane.b32.xlu0 %v258, 96
    %v365 = vpop.permute.xlu0 %364
    %v366 = vsel %vm89, %v365, 0
    %368 = vmatprep.subr.mxu0 0.0
    %369 = vmatpush1.xpose.msra.mxu0 %v366
    %370 = vmatprep.subr.mxu0 0.0
    %371 = vmatpush1.xpose.msra.mxu0 0.0
    %372 = vmatprep.subr.mxu0 0.0
    %373 = vmatpush1.xpose.msra.mxu0 0.0
    %374 = vmatprep.subr.mxu0 0.0
    %375 = vmatpush1.xpose.msra.mxu0 0.0
    %376 = vmatprep.subr.mxu0 0.0
    %377 = vmatpush1.xpose.msra.mxu0 0.0
    %378 = vmatprep.subr.mxu0 0.0
    %379 = vmatpush1.xpose.msra.mxu0 0.0
    %380 = vmatprep.subr.mxu0 0.0
    %381 = vmatpush1.xpose.msra.mxu0 0.0
    %382 = vmatprep.subr.mxu0 0.0
    %383 = vmatpush1.xpose.msra.mxu0 0.0
    %384 = vmatprep.subr.mxu0 0.0
    %385 = vmatpush1.xpose.msra.mxu0 0.0
    %386 = vmatprep.subr.mxu0 0.0
    %387 = vmatpush1.xpose.msra.mxu0 0.0
    %388 = vmatprep.subr.mxu0 0.0
    %389 = vmatpush1.xpose.msra.mxu0 0.0
    %390 = vmatprep.subr.mxu0 0.0
    %391 = vmatpush1.xpose.msra.mxu0 0.0
    %392 = vmatprep.subr.mxu0 0.0
    %393 = vmatpush1.xpose.msra.mxu0 0.0
    %394 = vmatprep.subr.mxu0 0.0
    %395 = vmatpush1.xpose.msra.mxu0 0.0
    %396 = vmatprep.subr.mxu0 0.0
    %397 = vmatpush1.xpose.msra.mxu0 0.0
    %398 = vmatprep.subr.mxu0 0.0
    %399 = vmatpush1.xpose.msra.mxu0 0.0
    %400 = vmatprep.subr.mxu0 0.0
    %401 = vmatpush1.xpose.msra.mxu0 0.0
    %402 = vmatprep.subr.mxu0 0.0
    %403 = vmatpush1.xpose.msra.mxu0 0.0
    %404 = vmatprep.subr.mxu0 0.0
    %405 = vmatpush1.xpose.msra.mxu0 0.0
    %406 = vmatprep.subr.mxu0 0.0
    %407 = vmatpush1.xpose.msra.mxu0 0.0
    %408 = vmatprep.subr.mxu0 0.0
    %409 = vmatpush1.xpose.msra.mxu0 0.0
    %410 = vmatprep.subr.mxu0 0.0
    %411 = vmatpush1.xpose.msra.mxu0 0.0
    %412 = vmatprep.subr.mxu0 0.0
    %413 = vmatpush1.xpose.msra.mxu0 0.0
    %414 = vmatprep.subr.mxu0 0.0
    %415 = vmatpush1.xpose.msra.mxu0 0.0
    %416 = vmatprep.subr.mxu0 0.0
    %417 = vmatpush1.xpose.msra.mxu0 0.0
    %418 = vmatprep.subr.mxu0 0.0
    %419 = vmatpush1.xpose.msra.mxu0 0.0
    %420 = vmatprep.subr.mxu0 0.0
    %421 = vmatpush1.xpose.msra.mxu0 0.0
    %422 = vmatprep.subr.mxu0 0.0
    %423 = vmatpush1.xpose.msra.mxu0 0.0
    %424 = vmatprep.subr.mxu0 0.0
    %425 = vmatpush1.xpose.msra.mxu0 0.0
    %426 = vmatprep.subr.mxu0 0.0
    %427 = vmatpush1.xpose.msra.mxu0 0.0
    %428 = vmatprep.subr.mxu0 0.0
    %429 = vmatpush1.xpose.msra.mxu0 0.0
    %430 = vmatprep.subr.mxu0 0.0
    %431 = vmatpush1.xpose.msra.mxu0 0.0
    %432 = vmatprep.mubr.f32.mxu0 0.0
    %433 = vmatmul.mubr.f32.gmra.mrb[0].mxu0 %v289
    %v434 = vpop.f32.mrb[0].mxu0
    %v435 = vadd.f32 0.0, %v434
    %v436 = vpop.f32.mrb[0].mxu0
    %437 = vdwg.mxu0
    %439 = vrot.lane.b32.xlu0 %v259, 96
    %v440 = vpop.permute.xlu0 %439
    %v441 = vsel %vm89, %v440, 0
    %443 = vmatprep.subr.mxu0 0.0
    %444 = vmatpush1.xpose.msra.mxu0 %v441
    %445 = vmatprep.subr.mxu0 0.0
    %446 = vmatpush1.xpose.msra.mxu0 0.0
    %447 = vmatprep.subr.mxu0 0.0
    %448 = vmatpush1.xpose.msra.mxu0 0.0
    %449 = vmatprep.subr.mxu0 0.0
    %450 = vmatpush1.xpose.msra.mxu0 0.0
    %451 = vmatprep.subr.mxu0 0.0
    %452 = vmatpush1.xpose.msra.mxu0 0.0
    %453 = vmatprep.subr.mxu0 0.0
    %454 = vmatpush1.xpose.msra.mxu0 0.0
    %455 = vmatprep.subr.mxu0 0.0
    %456 = vmatpush1.xpose.msra.mxu0 0.0
    %457 = vmatprep.subr.mxu0 0.0
    %458 = vmatpush1.xpose.msra.mxu0 0.0
    %459 = vmatprep.subr.mxu0 0.0
    %460 = vmatpush1.xpose.msra.mxu0 0.0
    %461 = vmatprep.subr.mxu0 0.0
    %462 = vmatpush1.xpose.msra.mxu0 0.0
    %463 = vmatprep.subr.mxu0 0.0
    %464 = vmatpush1.xpose.msra.mxu0 0.0
    %465 = vmatprep.subr.mxu0 0.0
    %466 = vmatpush1.xpose.msra.mxu0 0.0
    %467 = vmatprep.subr.mxu0 0.0
    %468 = vmatpush1.xpose.msra.mxu0 0.0
    %469 = vmatprep.subr.mxu0 0.0
    %470 = vmatpush1.xpose.msra.mxu0 0.0
    %471 = vmatprep.subr.mxu0 0.0
    %472 = vmatpush1.xpose.msra.mxu0 0.0
    %473 = vmatprep.subr.mxu0 0.0
    %474 = vmatpush1.xpose.msra.mxu0 0.0
    %475 = vmatprep.subr.mxu0 0.0
    %476 = vmatpush1.xpose.msra.mxu0 0.0
    %477 = vmatprep.subr.mxu0 0.0
    %478 = vmatpush1.xpose.msra.mxu0 0.0
    %479 = vmatprep.subr.mxu0 0.0
    %480 = vmatpush1.xpose.msra.mxu0 0.0
    %481 = vmatprep.subr.mxu0 0.0
    %482 = vmatpush1.xpose.msra.mxu0 0.0
    %483 = vmatprep.subr.mxu0 0.0
    %484 = vmatpush1.xpose.msra.mxu0 0.0
    %485 = vmatprep.subr.mxu0 0.0
    %486 = vmatpush1.xpose.msra.mxu0 0.0
    %487 = vmatprep.subr.mxu0 0.0
    %488 = vmatpush1.xpose.msra.mxu0 0.0
    %489 = vmatprep.subr.mxu0 0.0
    %490 = vmatpush1.xpose.msra.mxu0 0.0
    %491 = vmatprep.subr.mxu0 0.0
    %492 = vmatpush1.xpose.msra.mxu0 0.0
    %493 = vmatprep.subr.mxu0 0.0
    %494 = vmatpush1.xpose.msra.mxu0 0.0
    %495 = vmatprep.subr.mxu0 0.0
    %496 = vmatpush1.xpose.msra.mxu0 0.0
    %497 = vmatprep.subr.mxu0 0.0
    %498 = vmatpush1.xpose.msra.mxu0 0.0
    %499 = vmatprep.subr.mxu0 0.0
    %500 = vmatpush1.xpose.msra.mxu0 0.0
    %501 = vmatprep.subr.mxu0 0.0
    %502 = vmatpush1.xpose.msra.mxu0 0.0
    %503 = vmatprep.subr.mxu0 0.0
    %504 = vmatpush1.xpose.msra.mxu0 0.0
    %505 = vmatprep.subr.mxu0 0.0
    %506 = vmatpush1.xpose.msra.mxu0 0.0
    %507 = vmatprep.mubr.f32.mxu0 0.0
    %508 = vmatmul.mubr.f32.gmra.mrb[0].mxu0 %v289
    %v509 = vpop.f32.mrb[0].mxu0
    %v510 = vadd.f32 0.0, %v509
    %v511 = vpop.f32.mrb[0].mxu0
    %512 = vdwg.mxu0
    %514 = vrot.lane.b32.xlu0 %v260, 96
    %v515 = vpop.permute.xlu0 %514
    %v516 = vsel %vm89, %v515, 0
    %518 = vmatprep.subr.mxu0 0.0
    %519 = vmatpush1.xpose.msra.mxu0 %v516
    %520 = vmatprep.subr.mxu0 0.0
    %521 = vmatpush1.xpose.msra.mxu0 0.0
    %522 = vmatprep.subr.mxu0 0.0
    %523 = vmatpush1.xpose.msra.mxu0 0.0
    %524 = vmatprep.subr.mxu0 0.0
    %525 = vmatpush1.xpose.msra.mxu0 0.0
    %526 = vmatprep.subr.mxu0 0.0
    %527 = vmatpush1.xpose.msra.mxu0 0.0
    %528 = vmatprep.subr.mxu0 0.0
    %529 = vmatpush1.xpose.msra.mxu0 0.0
    %530 = vmatprep.subr.mxu0 0.0
    %531 = vmatpush1.xpose.msra.mxu0 0.0
    %532 = vmatprep.subr.mxu0 0.0
    %533 = vmatpush1.xpose.msra.mxu0 0.0
    %534 = vmatprep.subr.mxu0 0.0
    %535 = vmatpush1.xpose.msra.mxu0 0.0
    %536 = vmatprep.subr.mxu0 0.0
    %537 = vmatpush1.xpose.msra.mxu0 0.0
    %538 = vmatprep.subr.mxu0 0.0
    %539 = vmatpush1.xpose.msra.mxu0 0.0
    %540 = vmatprep.subr.mxu0 0.0
    %541 = vmatpush1.xpose.msra.mxu0 0.0
    %542 = vmatprep.subr.mxu0 0.0
    %543 = vmatpush1.xpose.msra.mxu0 0.0
    %544 = vmatprep.subr.mxu0 0.0
    %545 = vmatpush1.xpose.msra.mxu0 0.0
    %546 = vmatprep.subr.mxu0 0.0
    %547 = vmatpush1.xpose.msra.mxu0 0.0
    %548 = vmatprep.subr.mxu0 0.0
    %549 = vmatpush1.xpose.msra.mxu0 0.0
    %550 = vmatprep.subr.mxu0 0.0
    %551 = vmatpush1.xpose.msra.mxu0 0.0
    %552 = vmatprep.subr.mxu0 0.0
    %553 = vmatpush1.xpose.msra.mxu0 0.0
    %554 = vmatprep.subr.mxu0 0.0
    %555 = vmatpush1.xpose.msra.mxu0 0.0
    %556 = vmatprep.subr.mxu0 0.0
    %557 = vmatpush1.xpose.msra.mxu0 0.0
    %558 = vmatprep.subr.mxu0 0.0
    %559 = vmatpush1.xpose.msra.mxu0 0.0
    %560 = vmatprep.subr.mxu0 0.0
    %561 = vmatpush1.xpose.msra.mxu0 0.0
    %562 = vmatprep.subr.mxu0 0.0
    %563 = vmatpush1.xpose.msra.mxu0 0.0
    %564 = vmatprep.subr.mxu0 0.0
    %565 = vmatpush1.xpose.msra.mxu0 0.0
    %566 = vmatprep.subr.mxu0 0.0
    %567 = vmatpush1.xpose.msra.mxu0 0.0
    %568 = vmatprep.subr.mxu0 0.0
    %569 = vmatpush1.xpose.msra.mxu0 0.0
    %570 = vmatprep.subr.mxu0 0.0
    %571 = vmatpush1.xpose.msra.mxu0 0.0
    %572 = vmatprep.subr.mxu0 0.0
    %573 = vmatpush1.xpose.msra.mxu0 0.0
    %574 = vmatprep.subr.mxu0 0.0
    %575 = vmatpush1.xpose.msra.mxu0 0.0
    %576 = vmatprep.subr.mxu0 0.0
    %577 = vmatpush1.xpose.msra.mxu0 0.0
    %578 = vmatprep.subr.mxu0 0.0
    %579 = vmatpush1.xpose.msra.mxu0 0.0
    %580 = vmatprep.subr.mxu0 0.0
    %581 = vmatpush1.xpose.msra.mxu0 0.0
    %582 = vmatprep.mubr.f32.mxu0 0.0
    %583 = vmatmul.mubr.f32.gmra.mrb[0].mxu0 %v289
    %v584 = vpop.f32.mrb[0].mxu0
    %v585 = vadd.f32 0.0, %v584
    %v586 = vpop.f32.mrb[0].mxu0
    %587 = vdwg.mxu0
    %589 = vrot.lane.b32.xlu0 %v261, 96
    %v590 = vpop.permute.xlu0 %589
    %v592 = vsel %vm89, %v222, 0
    %v594 = vsel %vm89, %v590, 0
    %596 = vmatprep.subr.mxu0 0.0
    %597 = vmatpush1.xpose.msra.mxu0 %v594
    %598 = vmatprep.subr.mxu0 0.0
    %599 = vmatpush1.xpose.msra.mxu0 0.0
    %600 = vmatprep.subr.mxu0 0.0
    %601 = vmatpush1.xpose.msra.mxu0 0.0
    %602 = vmatprep.subr.mxu0 0.0
    %603 = vmatpush1.xpose.msra.mxu0 0.0
    %604 = vmatprep.subr.mxu0 0.0
    %605 = vmatpush1.xpose.msra.mxu0 0.0
    %606 = vmatprep.subr.mxu0 0.0
    %607 = vmatpush1.xpose.msra.mxu0 0.0
    %608 = vmatprep.subr.mxu0 0.0
    %609 = vmatpush1.xpose.msra.mxu0 0.0
    %610 = vmatprep.subr.mxu0 0.0
    %611 = vmatpush1.xpose.msra.mxu0 0.0
    %612 = vmatprep.subr.mxu0 0.0
    %613 = vmatpush1.xpose.msra.mxu0 0.0
    %614 = vmatprep.subr.mxu0 0.0
    %615 = vmatpush1.xpose.msra.mxu0 0.0
    %616 = vmatprep.subr.mxu0 0.0
    %617 = vmatpush1.xpose.msra.mxu0 0.0
    %618 = vmatprep.subr.mxu0 0.0
    %619 = vmatpush1.xpose.msra.mxu0 0.0
    %620 = vmatprep.subr.mxu0 0.0
    %621 = vmatpush1.xpose.msra.mxu0 0.0
    %622 = vmatprep.subr.mxu0 0.0
    %623 = vmatpush1.xpose.msra.mxu0 0.0
    %624 = vmatprep.subr.mxu0 0.0
    %625 = vmatpush1.xpose.msra.mxu0 0.0
    %626 = vmatprep.subr.mxu0 0.0
    %627 = vmatpush1.xpose.msra.mxu0 0.0
    %628 = vmatprep.subr.mxu0 0.0
    %629 = vmatpush1.xpose.msra.mxu0 0.0
    %630 = vmatprep.subr.mxu0 0.0
    %631 = vmatpush1.xpose.msra.mxu0 0.0
    %632 = vmatprep.subr.mxu0 0.0
    %633 = vmatpush1.xpose.msra.mxu0 0.0
    %634 = vmatprep.subr.mxu0 0.0
    %635 = vmatpush1.xpose.msra.mxu0 0.0
    %636 = vmatprep.subr.mxu0 0.0
    %637 = vmatpush1.xpose.msra.mxu0 0.0
    %638 = vmatprep.subr.mxu0 0.0
    %639 = vmatpush1.xpose.msra.mxu0 0.0
    %640 = vmatprep.subr.mxu0 0.0
    %641 = vmatpush1.xpose.msra.mxu0 0.0
    %642 = vmatprep.subr.mxu0 0.0
    %643 = vmatpush1.xpose.msra.mxu0 0.0
    %644 = vmatprep.subr.mxu0 0.0
    %645 = vmatpush1.xpose.msra.mxu0 0.0
    %646 = vmatprep.subr.mxu0 0.0
    %647 = vmatpush1.xpose.msra.mxu0 0.0
    %648 = vmatprep.subr.mxu0 0.0
    %649 = vmatpush1.xpose.msra.mxu0 0.0
    %650 = vmatprep.subr.mxu0 0.0
    %651 = vmatpush1.xpose.msra.mxu0 0.0
    %652 = vmatprep.subr.mxu0 0.0
    %653 = vmatpush1.xpose.msra.mxu0 0.0
    %654 = vmatprep.subr.mxu0 0.0
    %655 = vmatpush1.xpose.msra.mxu0 0.0
    %656 = vmatprep.subr.mxu0 0.0
    %657 = vmatpush1.xpose.msra.mxu0 0.0
    %658 = vmatprep.subr.mxu0 0.0
    %659 = vmatpush1.xpose.msra.mxu0 0.0
    %660 = vmatprep.mubr.f32.mxu0 0.0
    %661 = vmatmul.mubr.f32.gmra.mrb[0].mxu0 %v592
    %v662 = vpop.f32.mrb[0].mxu0
    %v663 = vadd.f32 0.0, %v662
    %v664 = vpop.f32.mrb[0].mxu0
    %665 = vdwg.mxu0
    %667 = vrot.lane.b32.xlu0 %v262, 96
    %v668 = vpop.permute.xlu0 %667
    %v669 = vsel %vm89, %v668, 0
    %671 = vmatprep.subr.mxu0 0.0
    %672 = vmatpush1.xpose.msra.mxu0 %v669
    %673 = vmatprep.subr.mxu0 0.0
    %674 = vmatpush1.xpose.msra.mxu0 0.0
    %675 = vmatprep.subr.mxu0 0.0
    %676 = vmatpush1.xpose.msra.mxu0 0.0
    %677 = vmatprep.subr.mxu0 0.0
    %678 = vmatpush1.xpose.msra.mxu0 0.0
    %679 = vmatprep.subr.mxu0 0.0
    %680 = vmatpush1.xpose.msra.mxu0 0.0
    %681 = vmatprep.subr.mxu0 0.0
    %682 = vmatpush1.xpose.msra.mxu0 0.0
    %683 = vmatprep.subr.mxu0 0.0
    %684 = vmatpush1.xpose.msra.mxu0 0.0
    %685 = vmatprep.subr.mxu0 0.0
    %686 = vmatpush1.xpose.msra.mxu0 0.0
    %687 = vmatprep.subr.mxu0 0.0
    %688 = vmatpush1.xpose.msra.mxu0 0.0
    %689 = vmatprep.subr.mxu0 0.0
    %690 = vmatpush1.xpose.msra.mxu0 0.0
    %691 = vmatprep.subr.mxu0 0.0
    %692 = vmatpush1.xpose.msra.mxu0 0.0
    %693 = vmatprep.subr.mxu0 0.0
    %694 = vmatpush1.xpose.msra.mxu0 0.0
    %695 = vmatprep.subr.mxu0 0.0
    %696 = vmatpush1.xpose.msra.mxu0 0.0
    %697 = vmatprep.subr.mxu0 0.0
    %698 = vmatpush1.xpose.msra.mxu0 0.0
    %699 = vmatprep.subr.mxu0 0.0
    %700 = vmatpush1.xpose.msra.mxu0 0.0
    %701 = vmatprep.subr.mxu0 0.0
    %702 = vmatpush1.xpose.msra.mxu0 0.0
    %703 = vmatprep.subr.mxu0 0.0
    %704 = vmatpush1.xpose.msra.mxu0 0.0
    %705 = vmatprep.subr.mxu0 0.0
    %706 = vmatpush1.xpose.msra.mxu0 0.0
    %707 = vmatprep.subr.mxu0 0.0
    %708 = vmatpush1.xpose.msra.mxu0 0.0
    %709 = vmatprep.subr.mxu0 0.0
    %710 = vmatpush1.xpose.msra.mxu0 0.0
    %711 = vmatprep.subr.mxu0 0.0
    %712 = vmatpush1.xpose.msra.mxu0 0.0
    %713 = vmatprep.subr.mxu0 0.0
    %714 = vmatpush1.xpose.msra.mxu0 0.0
    %715 = vmatprep.subr.mxu0 0.0
    %716 = vmatpush1.xpose.msra.mxu0 0.0
    %717 = vmatprep.subr.mxu0 0.0
    %718 = vmatpush1.xpose.msra.mxu0 0.0
    %719 = vmatprep.subr.mxu0 0.0
    %720 = vmatpush1.xpose.msra.mxu0 0.0
    %721 = vmatprep.subr.mxu0 0.0
    %722 = vmatpush1.xpose.msra.mxu0 0.0
    %723 = vmatprep.subr.mxu0 0.0
    %724 = vmatpush1.xpose.msra.mxu0 0.0
    %725 = vmatprep.subr.mxu0 0.0
    %726 = vmatpush1.xpose.msra.mxu0 0.0
    %727 = vmatprep.subr.mxu0 0.0
    %728 = vmatpush1.xpose.msra.mxu0 0.0
    %729 = vmatprep.subr.mxu0 0.0
    %730 = vmatpush1.xpose.msra.mxu0 0.0
    %731 = vmatprep.subr.mxu0 0.0
    %732 = vmatpush1.xpose.msra.mxu0 0.0
    %733 = vmatprep.subr.mxu0 0.0
    %734 = vmatpush1.xpose.msra.mxu0 0.0
    %735 = vmatprep.mubr.f32.mxu0 0.0
    %736 = vmatmul.mubr.f32.gmra.mrb[0].mxu0 %v592
    %v737 = vpop.f32.mrb[0].mxu0
    %v738 = vadd.f32 0.0, %v737
    %v739 = vpop.f32.mrb[0].mxu0
    %740 = vdwg.mxu0
    %742 = vrot.lane.b32.xlu0 %v263, 96
    %v743 = vpop.permute.xlu0 %742
    %v744 = vsel %vm89, %v743, 0
    %746 = vmatprep.subr.mxu0 0.0
    %747 = vmatpush1.xpose.msra.mxu0 %v744
    %748 = vmatprep.subr.mxu0 0.0
    %749 = vmatpush1.xpose.msra.mxu0 0.0
    %750 = vmatprep.subr.mxu0 0.0
    %751 = vmatpush1.xpose.msra.mxu0 0.0
    %752 = vmatprep.subr.mxu0 0.0
    %753 = vmatpush1.xpose.msra.mxu0 0.0
    %754 = vmatprep.subr.mxu0 0.0
    %755 = vmatpush1.xpose.msra.mxu0 0.0
    %756 = vmatprep.subr.mxu0 0.0
    %757 = vmatpush1.xpose.msra.mxu0 0.0
    %758 = vmatprep.subr.mxu0 0.0
    %759 = vmatpush1.xpose.msra.mxu0 0.0
    %760 = vmatprep.subr.mxu0 0.0
    %761 = vmatpush1.xpose.msra.mxu0 0.0
    %762 = vmatprep.subr.mxu0 0.0
    %763 = vmatpush1.xpose.msra.mxu0 0.0
    %764 = vmatprep.subr.mxu0 0.0
    %765 = vmatpush1.xpose.msra.mxu0 0.0
    %766 = vmatprep.subr.mxu0 0.0
    %767 = vmatpush1.xpose.msra.mxu0 0.0
    %768 = vmatprep.subr.mxu0 0.0
    %769 = vmatpush1.xpose.msra.mxu0 0.0
    %770 = vmatprep.subr.mxu0 0.0
    %771 = vmatpush1.xpose.msra.mxu0 0.0
    %772 = vmatprep.subr.mxu0 0.0
    %773 = vmatpush1.xpose.msra.mxu0 0.0
    %774 = vmatprep.subr.mxu0 0.0
    %775 = vmatpush1.xpose.msra.mxu0 0.0
    %776 = vmatprep.subr.mxu0 0.0
    %777 = vmatpush1.xpose.msra.mxu0 0.0
    %778 = vmatprep.subr.mxu0 0.0
    %779 = vmatpush1.xpose.msra.mxu0 0.0
    %780 = vmatprep.subr.mxu0 0.0
    %781 = vmatpush1.xpose.msra.mxu0 0.0
    %782 = vmatprep.subr.mxu0 0.0
    %783 = vmatpush1.xpose.msra.mxu0 0.0
    %784 = vmatprep.subr.mxu0 0.0
    %785 = vmatpush1.xpose.msra.mxu0 0.0
    %786 = vmatprep.subr.mxu0 0.0
    %787 = vmatpush1.xpose.msra.mxu0 0.0
    %788 = vmatprep.subr.mxu0 0.0
    %789 = vmatpush1.xpose.msra.mxu0 0.0
    %790 = vmatprep.subr.mxu0 0.0
    %791 = vmatpush1.xpose.msra.mxu0 0.0
    %792 = vmatprep.subr.mxu0 0.0
    %793 = vmatpush1.xpose.msra.mxu0 0.0
    %794 = vmatprep.subr.mxu0 0.0
    %795 = vmatpush1.xpose.msra.mxu0 0.0
    %796 = vmatprep.subr.mxu0 0.0
    %797 = vmatpush1.xpose.msra.mxu0 0.0
    %798 = vmatprep.subr.mxu0 0.0
    %799 = vmatpush1.xpose.msra.mxu0 0.0
    %800 = vmatprep.subr.mxu0 0.0
    %801 = vmatpush1.xpose.msra.mxu0 0.0
    %802 = vmatprep.subr.mxu0 0.0
    %803 = vmatpush1.xpose.msra.mxu0 0.0
    %804 = vmatprep.subr.mxu0 0.0
    %805 = vmatpush1.xpose.msra.mxu0 0.0
    %806 = vmatprep.subr.mxu0 0.0
    %807 = vmatpush1.xpose.msra.mxu0 0.0
    %808 = vmatprep.subr.mxu0 0.0
    %809 = vmatpush1.xpose.msra.mxu0 0.0
    %810 = vmatprep.mubr.f32.mxu0 0.0
    %811 = vmatmul.mubr.f32.gmra.mrb[0].mxu0 %v592
    %v812 = vpop.f32.mrb[0].mxu0
    %v813 = vadd.f32 0.0, %v812
    %v814 = vpop.f32.mrb[0].mxu0
    %815 = vdwg.mxu0
    %817 = vrot.lane.b32.xlu0 %v264, 96
    %v818 = vpop.permute.xlu0 %817
    %v819 = vsel %vm89, %v818, 0
    %821 = vmatprep.subr.mxu0 0.0
    %822 = vmatpush1.xpose.msra.mxu0 %v819
    %823 = vmatprep.subr.mxu0 0.0
    %824 = vmatpush1.xpose.msra.mxu0 0.0
    %825 = vmatprep.subr.mxu0 0.0
    %826 = vmatpush1.xpose.msra.mxu0 0.0
    %827 = vmatprep.subr.mxu0 0.0
    %828 = vmatpush1.xpose.msra.mxu0 0.0
    %829 = vmatprep.subr.mxu0 0.0
    %830 = vmatpush1.xpose.msra.mxu0 0.0
    %831 = vmatprep.subr.mxu0 0.0
    %832 = vmatpush1.xpose.msra.mxu0 0.0
    %833 = vmatprep.subr.mxu0 0.0
    %834 = vmatpush1.xpose.msra.mxu0 0.0
    %835 = vmatprep.subr.mxu0 0.0
    %836 = vmatpush1.xpose.msra.mxu0 0.0
    %837 = vmatprep.subr.mxu0 0.0
    %838 = vmatpush1.xpose.msra.mxu0 0.0
    %839 = vmatprep.subr.mxu0 0.0
    %840 = vmatpush1.xpose.msra.mxu0 0.0
    %841 = vmatprep.subr.mxu0 0.0
    %842 = vmatpush1.xpose.msra.mxu0 0.0
    %843 = vmatprep.subr.mxu0 0.0
    %844 = vmatpush1.xpose.msra.mxu0 0.0
    %845 = vmatprep.subr.mxu0 0.0
    %846 = vmatpush1.xpose.msra.mxu0 0.0
    %847 = vmatprep.subr.mxu0 0.0
    %848 = vmatpush1.xpose.msra.mxu0 0.0
    %849 = vmatprep.subr.mxu0 0.0
    %850 = vmatpush1.xpose.msra.mxu0 0.0
    %851 = vmatprep.subr.mxu0 0.0
    %852 = vmatpush1.xpose.msra.mxu0 0.0
    %853 = vmatprep.subr.mxu0 0.0
    %854 = vmatpush1.xpose.msra.mxu0 0.0
    %855 = vmatprep.subr.mxu0 0.0
    %856 = vmatpush1.xpose.msra.mxu0 0.0
    %857 = vmatprep.subr.mxu0 0.0
    %858 = vmatpush1.xpose.msra.mxu0 0.0
    %859 = vmatprep.subr.mxu0 0.0
    %860 = vmatpush1.xpose.msra.mxu0 0.0
    %861 = vmatprep.subr.mxu0 0.0
    %862 = vmatpush1.xpose.msra.mxu0 0.0
    %863 = vmatprep.subr.mxu0 0.0
    %864 = vmatpush1.xpose.msra.mxu0 0.0
    %865 = vmatprep.subr.mxu0 0.0
    %866 = vmatpush1.xpose.msra.mxu0 0.0
    %867 = vmatprep.subr.mxu0 0.0
    %868 = vmatpush1.xpose.msra.mxu0 0.0
    %869 = vmatprep.subr.mxu0 0.0
    %870 = vmatpush1.xpose.msra.mxu0 0.0
    %871 = vmatprep.subr.mxu0 0.0
    %872 = vmatpush1.xpose.msra.mxu0 0.0
    %873 = vmatprep.subr.mxu0 0.0
    %874 = vmatpush1.xpose.msra.mxu0 0.0
    %875 = vmatprep.subr.mxu0 0.0
    %876 = vmatpush1.xpose.msra.mxu0 0.0
    %877 = vmatprep.subr.mxu0 0.0
    %878 = vmatpush1.xpose.msra.mxu0 0.0
    %879 = vmatprep.subr.mxu0 0.0
    %880 = vmatpush1.xpose.msra.mxu0 0.0
    %881 = vmatprep.subr.mxu0 0.0
    %882 = vmatpush1.xpose.msra.mxu0 0.0
    %883 = vmatprep.subr.mxu0 0.0
    %884 = vmatpush1.xpose.msra.mxu0 0.0
    %885 = vmatprep.mubr.f32.mxu0 0.0
    %886 = vmatmul.mubr.f32.gmra.mrb[0].mxu0 %v592
    %v887 = vpop.f32.mrb[0].mxu0
    %v888 = vadd.f32 0.0, %v887
    %v889 = vpop.f32.mrb[0].mxu0
    %890 = vdwg.mxu0
    %v891 = vadd.f32 %v360, %v81
    %v892 = vadd.f32 %v435, %v81
    %v893 = vadd.f32 %v510, %v81
    %v894 = vadd.f32 %v585, %v81
    %v895 = vadd.f32 %v663, %v82
    %v896 = vadd.f32 %v738, %v82
    %v897 = vadd.f32 %v813, %v82
    %v898 = vadd.f32 %v888, %v82
    %vm899 = vcmask 64512
    %v900 = vsel %vm899, %v891, -inf
    %901 = vmax.xlane.f32.xlu0 %v900
    %v902 = vpop.xlane.xlu0 %901
    %v903 = vsel %vm899, %v892, -inf
    %904 = vmax.xlane.f32.xlu0 %v903
    %v905 = vpop.xlane.xlu0 %904
    %v906 = vsel %vm899, %v893, -inf
    %907 = vmax.xlane.f32.xlu0 %v906
    %v908 = vpop.xlane.xlu0 %907
    %v909 = vsel %vm899, %v894, -inf
    %910 = vmax.xlane.f32.xlu0 %v909
    %v911 = vpop.xlane.xlu0 %910
    %v912 = vsel %vm899, %v895, -inf
    %913 = vmax.xlane.f32.xlu0 %v912
    %v914 = vpop.xlane.xlu0 %913
    %v915 = vsel %vm899, %v896, -inf
    %916 = vmax.xlane.f32.xlu0 %v915
    %v917 = vpop.xlane.xlu0 %916
    %v918 = vsel %vm899, %v897, -inf
    %919 = vmax.xlane.f32.xlu0 %v918
    %v920 = vpop.xlane.xlu0 %919
    %v921 = vsel %vm899, %v898, -inf
    %922 = vmax.xlane.f32.xlu0 %v921
    %v923 = vpop.xlane.xlu0 %922
    %v924 = vsub.f32 %v891, %v902
    %v925 = vsub.f32 %v892, %v905
    %v926 = vsub.f32 %v893, %v908
    %v927 = vsub.f32 %v894, %v911
    %v928 = vsub.f32 %v895, %v914
    %v929 = vsub.f32 %v896, %v917
    %v930 = vsub.f32 %v897, %v920
    %v931 = vsub.f32 %v898, %v923
    %v932 = vmul.f32 %v924, 1.442695
    %v933 = vpow.pop %v932
    %v934 = vmul.f32 %v925, 1.442695
    %v935 = vpow.pop %v934
    %v936 = vmul.f32 %v926, 1.442695
    %v937 = vpow.pop %v936
    %v938 = vmul.f32 %v927, 1.442695
    %v939 = vpow.pop %v938
    %v940 = vmul.f32 %v928, 1.442695
    %v941 = vpow.pop %v940
    %v942 = vmul.f32 %v929, 1.442695
    %v943 = vpow.pop %v942
    %v944 = vmul.f32 %v930, 1.442695
    %v945 = vpow.pop %v944
    %v946 = vmul.f32 %v931, 1.442695
    %v947 = vpow.pop %v946
    %v948 = vsel %vm899, %v933, 0.0
    %949 = vadd.xlane.f32.xlu0 %v948
    %v950 = vpop.xlane.xlu0 %949
    %v951 = vsel %vm899, %v935, 0.0
    %952 = vadd.xlane.f32.xlu0 %v951
    %v953 = vpop.xlane.xlu0 %952
    %v954 = vsel %vm899, %v937, 0.0
    %955 = vadd.xlane.f32.xlu0 %v954
    %v956 = vpop.xlane.xlu0 %955
    %v957 = vsel %vm899, %v939, 0.0
    %958 = vadd.xlane.f32.xlu0 %v957
    %v959 = vpop.xlane.xlu0 %958
    %v960 = vsel %vm899, %v941, 0.0
    %961 = vadd.xlane.f32.xlu0 %v960
    %v962 = vpop.xlane.xlu0 %961
    %v963 = vsel %vm899, %v943, 0.0
    %964 = vadd.xlane.f32.xlu0 %v963
    %v965 = vpop.xlane.xlu0 %964
    %v966 = vsel %vm899, %v945, 0.0
    %967 = vadd.xlane.f32.xlu0 %v966
    %v968 = vpop.xlane.xlu0 %967
    %v969 = vsel %vm899, %v947, 0.0
    %970 = vadd.xlane.f32.xlu0 %v969
    %v971 = vpop.xlane.xlu0 %970
    %v972 = vrcp.pop %v950
    %v973 = vrcp.pop %v953
    %v974 = vrcp.pop %v956
    %v975 = vrcp.pop %v959
    %v976 = vrcp.pop %v962
    %v977 = vrcp.pop %v965
    %v978 = vrcp.pop %v968
    %v979 = vrcp.pop %v971
    %v980 = vmul.f32 %v933, %v972
    %v981 = vmul.f32 %v935, %v973
    %v982 = vmul.f32 %v937, %v974
    %v983 = vmul.f32 %v939, %v975
    %v984 = vmul.f32 %v941, %v976
    %v985 = vmul.f32 %v943, %v977
    %v986 = vmul.f32 %v945, %v978
    %v987 = vmul.f32 %v947, %v979
    %989 = vrot.lane.b32.xlu0 %v277, 64
    %v990 = vpop.permute.xlu0 %989
    %v993 = vsel %vm899, %v980, 0
    %995 = vmatprep.subr.mxu0 0.0
    %996 = vmatpush1.msra.mxu0 %v990
    %997 = vmatprep.subr.mxu0 0.0
    %998 = vmatpush1.msra.mxu0 0.0
    %999 = vmatprep.subr.mxu0 0.0
    %1000 = vmatpush1.msra.mxu0 0.0
    %1001 = vmatprep.subr.mxu0 0.0
    %1002 = vmatpush1.msra.mxu0 0.0
    %1003 = vmatprep.subr.mxu0 0.0
    %1004 = vmatpush1.msra.mxu0 0.0
    %1005 = vmatprep.subr.mxu0 0.0
    %1006 = vmatpush1.msra.mxu0 0.0
    %1007 = vmatprep.subr.mxu0 0.0
    %1008 = vmatpush1.msra.mxu0 0.0
    %1009 = vmatprep.subr.mxu0 0.0
    %1010 = vmatpush1.msra.mxu0 0.0
    %1011 = vmatprep.subr.mxu0 0.0
    %1012 = vmatpush1.msra.mxu0 0.0
    %1013 = vmatprep.subr.mxu0 0.0
    %1014 = vmatpush1.msra.mxu0 0.0
    %1015 = vmatprep.subr.mxu0 0.0
    %1016 = vmatpush1.msra.mxu0 0.0
    %1017 = vmatprep.subr.mxu0 0.0
    %1018 = vmatpush1.msra.mxu0 0.0
    %1019 = vmatprep.subr.mxu0 0.0
    %1020 = vmatpush1.msra.mxu0 0.0
    %1021 = vmatprep.subr.mxu0 0.0
    %1022 = vmatpush1.msra.mxu0 0.0
    %1023 = vmatprep.subr.mxu0 0.0
    %1024 = vmatpush1.msra.mxu0 0.0
    %1025 = vmatprep.subr.mxu0 0.0
    %1026 = vmatpush1.msra.mxu0 0.0
    %1027 = vmatprep.subr.mxu0 0.0
    %1028 = vmatpush1.msra.mxu0 0.0
    %1029 = vmatprep.subr.mxu0 0.0
    %1030 = vmatpush1.msra.mxu0 0.0
    %1031 = vmatprep.subr.mxu0 0.0
    %1032 = vmatpush1.msra.mxu0 0.0
    %1033 = vmatprep.subr.mxu0 0.0
    %1034 = vmatpush1.msra.mxu0 0.0
    %1035 = vmatprep.subr.mxu0 0.0
    %1036 = vmatpush1.msra.mxu0 0.0
    %1037 = vmatprep.subr.mxu0 0.0
    %1038 = vmatpush1.msra.mxu0 0.0
    %1039 = vmatprep.subr.mxu0 0.0
    %1040 = vmatpush1.msra.mxu0 0.0
    %1041 = vmatprep.subr.mxu0 0.0
    %1042 = vmatpush1.msra.mxu0 0.0
    %1043 = vmatprep.subr.mxu0 0.0
    %1044 = vmatpush1.msra.mxu0 0.0
    %1045 = vmatprep.subr.mxu0 0.0
    %1046 = vmatpush1.msra.mxu0 0.0
    %1047 = vmatprep.subr.mxu0 0.0
    %1048 = vmatpush1.msra.mxu0 0.0
    %1049 = vmatprep.subr.mxu0 0.0
    %1050 = vmatpush1.msra.mxu0 0.0
    %1051 = vmatprep.subr.mxu0 0.0
    %1052 = vmatpush1.msra.mxu0 0.0
    %1053 = vmatprep.subr.mxu0 0.0
    %1054 = vmatpush1.msra.mxu0 0.0
    %1055 = vmatprep.subr.mxu0 0.0
    %1056 = vmatpush1.msra.mxu0 0.0
    %1057 = vmatprep.subr.mxu0 0.0
    %1058 = vmatpush1.msra.mxu0 0.0
    %1059 = vmatprep.mubr.f32.mxu0 0.0
    %1060 = vmatmul.mubr.f32.gmra.mrb[0].mxu0 %v993
    %v1061 = vpop.f32.mrb[0].mxu0
    %v1062 = vadd.f32 0.0, %v1061
    %v1063 = vpop.f32.mrb[0].mxu0
    %1064 = vdwg.mxu0
    %1066 = vrot.lane.b32.xlu0 %v278, 64
    %v1067 = vpop.permute.xlu0 %1066
    %v1070 = vsel %vm899, %v981, 0
    %1072 = vmatprep.subr.mxu0 0.0
    %1073 = vmatpush1.msra.mxu0 %v1067
    %1074 = vmatprep.subr.mxu0 0.0
    %1075 = vmatpush1.msra.mxu0 0.0
    %1076 = vmatprep.subr.mxu0 0.0
    %1077 = vmatpush1.msra.mxu0 0.0
    %1078 = vmatprep.subr.mxu0 0.0
    %1079 = vmatpush1.msra.mxu0 0.0
    %1080 = vmatprep.subr.mxu0 0.0
    %1081 = vmatpush1.msra.mxu0 0.0
    %1082 = vmatprep.subr.mxu0 0.0
    %1083 = vmatpush1.msra.mxu0 0.0
    %1084 = vmatprep.subr.mxu0 0.0
    %1085 = vmatpush1.msra.mxu0 0.0
    %1086 = vmatprep.subr.mxu0 0.0
    %1087 = vmatpush1.msra.mxu0 0.0
    %1088 = vmatprep.subr.mxu0 0.0
    %1089 = vmatpush1.msra.mxu0 0.0
    %1090 = vmatprep.subr.mxu0 0.0
    %1091 = vmatpush1.msra.mxu0 0.0
    %1092 = vmatprep.subr.mxu0 0.0
    %1093 = vmatpush1.msra.mxu0 0.0
    %1094 = vmatprep.subr.mxu0 0.0
    %1095 = vmatpush1.msra.mxu0 0.0
    %1096 = vmatprep.subr.mxu0 0.0
    %1097 = vmatpush1.msra.mxu0 0.0
    %1098 = vmatprep.subr.mxu0 0.0
    %1099 = vmatpush1.msra.mxu0 0.0
    %1100 = vmatprep.subr.mxu0 0.0
    %1101 = vmatpush1.msra.mxu0 0.0
    %1102 = vmatprep.subr.mxu0 0.0
    %1103 = vmatpush1.msra.mxu0 0.0
    %1104 = vmatprep.subr.mxu0 0.0
    %1105 = vmatpush1.msra.mxu0 0.0
    %1106 = vmatprep.subr.mxu0 0.0
    %1107 = vmatpush1.msra.mxu0 0.0
    %1108 = vmatprep.subr.mxu0 0.0
    %1109 = vmatpush1.msra.mxu0 0.0
    %1110 = vmatprep.subr.mxu0 0.0
    %1111 = vmatpush1.msra.mxu0 0.0
    %1112 = vmatprep.subr.mxu0 0.0
    %1113 = vmatpush1.msra.mxu0 0.0
    %1114 = vmatprep.subr.mxu0 0.0
    %1115 = vmatpush1.msra.mxu0 0.0
    %1116 = vmatprep.subr.mxu0 0.0
    %1117 = vmatpush1.msra.mxu0 0.0
    %1118 = vmatprep.subr.mxu0 0.0
    %1119 = vmatpush1.msra.mxu0 0.0
    %1120 = vmatprep.subr.mxu0 0.0
    %1121 = vmatpush1.msra.mxu0 0.0
    %1122 = vmatprep.subr.mxu0 0.0
    %1123 = vmatpush1.msra.mxu0 0.0
    %1124 = vmatprep.subr.mxu0 0.0
    %1125 = vmatpush1.msra.mxu0 0.0
    %1126 = vmatprep.subr.mxu0 0.0
    %1127 = vmatpush1.msra.mxu0 0.0
    %1128 = vmatprep.subr.mxu0 0.0
    %1129 = vmatpush1.msra.mxu0 0.0
    %1130 = vmatprep.subr.mxu0 0.0
    %1131 = vmatpush1.msra.mxu0 0.0
    %1132 = vmatprep.subr.mxu0 0.0
    %1133 = vmatpush1.msra.mxu0 0.0
    %1134 = vmatprep.subr.mxu0 0.0
    %1135 = vmatpush1.msra.mxu0 0.0
    %1136 = vmatprep.mubr.f32.mxu0 0.0
    %1137 = vmatmul.mubr.f32.gmra.mrb[0].mxu0 %v1070
    %v1138 = vpop.f32.mrb[0].mxu0
    %v1139 = vadd.f32 0.0, %v1138
    %v1140 = vpop.f32.mrb[0].mxu0
    %1141 = vdwg.mxu0
    %1143 = vrot.lane.b32.xlu0 %v279, 64
    %v1144 = vpop.permute.xlu0 %1143
    %v1147 = vsel %vm899, %v982, 0
    %1149 = vmatprep.subr.mxu0 0.0
    %1150 = vmatpush1.msra.mxu0 %v1144
    %1151 = vmatprep.subr.mxu0 0.0
    %1152 = vmatpush1.msra.mxu0 0.0
    %1153 = vmatprep.subr.mxu0 0.0
    %1154 = vmatpush1.msra.mxu0 0.0
    %1155 = vmatprep.subr.mxu0 0.0
    %1156 = vmatpush1.msra.mxu0 0.0
    %1157 = vmatprep.subr.mxu0 0.0
    %1158 = vmatpush1.msra.mxu0 0.0
    %1159 = vmatprep.subr.mxu0 0.0
    %1160 = vmatpush1.msra.mxu0 0.0
    %1161 = vmatprep.subr.mxu0 0.0
    %1162 = vmatpush1.msra.mxu0 0.0
    %1163 = vmatprep.subr.mxu0 0.0
    %1164 = vmatpush1.msra.mxu0 0.0
    %1165 = vmatprep.subr.mxu0 0.0
    %1166 = vmatpush1.msra.mxu0 0.0
    %1167 = vmatprep.subr.mxu0 0.0
    %1168 = vmatpush1.msra.mxu0 0.0
    %1169 = vmatprep.subr.mxu0 0.0
    %1170 = vmatpush1.msra.mxu0 0.0
    %1171 = vmatprep.subr.mxu0 0.0
    %1172 = vmatpush1.msra.mxu0 0.0
    %1173 = vmatprep.subr.mxu0 0.0
    %1174 = vmatpush1.msra.mxu0 0.0
    %1175 = vmatprep.subr.mxu0 0.0
    %1176 = vmatpush1.msra.mxu0 0.0
    %1177 = vmatprep.subr.mxu0 0.0
    %1178 = vmatpush1.msra.mxu0 0.0
    %1179 = vmatprep.subr.mxu0 0.0
    %1180 = vmatpush1.msra.mxu0 0.0
    %1181 = vmatprep.subr.mxu0 0.0
    %1182 = vmatpush1.msra.mxu0 0.0
    %1183 = vmatprep.subr.mxu0 0.0
    %1184 = vmatpush1.msra.mxu0 0.0
    %1185 = vmatprep.subr.mxu0 0.0
    %1186 = vmatpush1.msra.mxu0 0.0
    %1187 = vmatprep.subr.mxu0 0.0
    %1188 = vmatpush1.msra.mxu0 0.0
    %1189 = vmatprep.subr.mxu0 0.0
    %1190 = vmatpush1.msra.mxu0 0.0
    %1191 = vmatprep.subr.mxu0 0.0
    %1192 = vmatpush1.msra.mxu0 0.0
    %1193 = vmatprep.subr.mxu0 0.0
    %1194 = vmatpush1.msra.mxu0 0.0
    %1195 = vmatprep.subr.mxu0 0.0
    %1196 = vmatpush1.msra.mxu0 0.0
    %1197 = vmatprep.subr.mxu0 0.0
    %1198 = vmatpush1.msra.mxu0 0.0
    %1199 = vmatprep.subr.mxu0 0.0
    %1200 = vmatpush1.msra.mxu0 0.0
    %1201 = vmatprep.subr.mxu0 0.0
    %1202 = vmatpush1.msra.mxu0 0.0
    %1203 = vmatprep.subr.mxu0 0.0
    %1204 = vmatpush1.msra.mxu0 0.0
    %1205 = vmatprep.subr.mxu0 0.0
    %1206 = vmatpush1.msra.mxu0 0.0
    %1207 = vmatprep.subr.mxu0 0.0
    %1208 = vmatpush1.msra.mxu0 0.0
    %1209 = vmatprep.subr.mxu0 0.0
    %1210 = vmatpush1.msra.mxu0 0.0
    %1211 = vmatprep.subr.mxu0 0.0
    %1212 = vmatpush1.msra.mxu0 0.0
    %1213 = vmatprep.mubr.f32.mxu0 0.0
    %1214 = vmatmul.mubr.f32.gmra.mrb[0].mxu0 %v1147
    %v1215 = vpop.f32.mrb[0].mxu0
    %v1216 = vadd.f32 0.0, %v1215
    %v1217 = vpop.f32.mrb[0].mxu0
    %1218 = vdwg.mxu0
    %1220 = vrot.lane.b32.xlu0 %v280, 64
    %v1221 = vpop.permute.xlu0 %1220
    %v1224 = vsel %vm899, %v983, 0
    %1226 = vmatprep.subr.mxu0 0.0
    %1227 = vmatpush1.msra.mxu0 %v1221
    %1228 = vmatprep.subr.mxu0 0.0
    %1229 = vmatpush1.msra.mxu0 0.0
    %1230 = vmatprep.subr.mxu0 0.0
    %1231 = vmatpush1.msra.mxu0 0.0
    %1232 = vmatprep.subr.mxu0 0.0
    %1233 = vmatpush1.msra.mxu0 0.0
    %1234 = vmatprep.subr.mxu0 0.0
    %1235 = vmatpush1.msra.mxu0 0.0
    %1236 = vmatprep.subr.mxu0 0.0
    %1237 = vmatpush1.msra.mxu0 0.0
    %1238 = vmatprep.subr.mxu0 0.0
    %1239 = vmatpush1.msra.mxu0 0.0
    %1240 = vmatprep.subr.mxu0 0.0
    %1241 = vmatpush1.msra.mxu0 0.0
    %1242 = vmatprep.subr.mxu0 0.0
    %1243 = vmatpush1.msra.mxu0 0.0
    %1244 = vmatprep.subr.mxu0 0.0
    %1245 = vmatpush1.msra.mxu0 0.0
    %1246 = vmatprep.subr.mxu0 0.0
    %1247 = vmatpush1.msra.mxu0 0.0
    %1248 = vmatprep.subr.mxu0 0.0
    %1249 = vmatpush1.msra.mxu0 0.0
    %1250 = vmatprep.subr.mxu0 0.0
    %1251 = vmatpush1.msra.mxu0 0.0
    %1252 = vmatprep.subr.mxu0 0.0
    %1253 = vmatpush1.msra.mxu0 0.0
    %1254 = vmatprep.subr.mxu0 0.0
    %1255 = vmatpush1.msra.mxu0 0.0
    %1256 = vmatprep.subr.mxu0 0.0
    %1257 = vmatpush1.msra.mxu0 0.0
    %1258 = vmatprep.subr.mxu0 0.0
    %1259 = vmatpush1.msra.mxu0 0.0
    %1260 = vmatprep.subr.mxu0 0.0
    %1261 = vmatpush1.msra.mxu0 0.0
    %1262 = vmatprep.subr.mxu0 0.0
    %1263 = vmatpush1.msra.mxu0 0.0
    %1264 = vmatprep.subr.mxu0 0.0
    %1265 = vmatpush1.msra.mxu0 0.0
    %1266 = vmatprep.subr.mxu0 0.0
    %1267 = vmatpush1.msra.mxu0 0.0
    %1268 = vmatprep.subr.mxu0 0.0
    %1269 = vmatpush1.msra.mxu0 0.0
    %1270 = vmatprep.subr.mxu0 0.0
    %1271 = vmatpush1.msra.mxu0 0.0
    %1272 = vmatprep.subr.mxu0 0.0
    %1273 = vmatpush1.msra.mxu0 0.0
    %1274 = vmatprep.subr.mxu0 0.0
    %1275 = vmatpush1.msra.mxu0 0.0
    %1276 = vmatprep.subr.mxu0 0.0
    %1277 = vmatpush1.msra.mxu0 0.0
    %1278 = vmatprep.subr.mxu0 0.0
    %1279 = vmatpush1.msra.mxu0 0.0
    %1280 = vmatprep.subr.mxu0 0.0
    %1281 = vmatpush1.msra.mxu0 0.0
    %1282 = vmatprep.subr.mxu0 0.0
    %1283 = vmatpush1.msra.mxu0 0.0
    %1284 = vmatprep.subr.mxu0 0.0
    %1285 = vmatpush1.msra.mxu0 0.0
    %1286 = vmatprep.subr.mxu0 0.0
    %1287 = vmatpush1.msra.mxu0 0.0
    %1288 = vmatprep.subr.mxu0 0.0
    %1289 = vmatpush1.msra.mxu0 0.0
    %1290 = vmatprep.mubr.f32.mxu0 0.0
    %1291 = vmatmul.mubr.f32.gmra.mrb[0].mxu0 %v1224
    %v1292 = vpop.f32.mrb[0].mxu0
    %v1293 = vadd.f32 0.0, %v1292
    %v1294 = vpop.f32.mrb[0].mxu0
    %1295 = vdwg.mxu0
    %1297 = vrot.lane.b32.xlu0 %v281, 64
    %v1298 = vpop.permute.xlu0 %1297
    %v1301 = vsel %vm899, %v984, 0
    %1303 = vmatprep.subr.mxu0 0.0
    %1304 = vmatpush1.msra.mxu0 %v1298
    %1305 = vmatprep.subr.mxu0 0.0
    %1306 = vmatpush1.msra.mxu0 0.0
    %1307 = vmatprep.subr.mxu0 0.0
    %1308 = vmatpush1.msra.mxu0 0.0
    %1309 = vmatprep.subr.mxu0 0.0
    %1310 = vmatpush1.msra.mxu0 0.0
    %1311 = vmatprep.subr.mxu0 0.0
    %1312 = vmatpush1.msra.mxu0 0.0
    %1313 = vmatprep.subr.mxu0 0.0
    %1314 = vmatpush1.msra.mxu0 0.0
    %1315 = vmatprep.subr.mxu0 0.0
    %1316 = vmatpush1.msra.mxu0 0.0
    %1317 = vmatprep.subr.mxu0 0.0
    %1318 = vmatpush1.msra.mxu0 0.0
    %1319 = vmatprep.subr.mxu0 0.0
    %1320 = vmatpush1.msra.mxu0 0.0
    %1321 = vmatprep.subr.mxu0 0.0
    %1322 = vmatpush1.msra.mxu0 0.0
    %1323 = vmatprep.subr.mxu0 0.0
    %1324 = vmatpush1.msra.mxu0 0.0
    %1325 = vmatprep.subr.mxu0 0.0
    %1326 = vmatpush1.msra.mxu0 0.0
    %1327 = vmatprep.subr.mxu0 0.0
    %1328 = vmatpush1.msra.mxu0 0.0
    %1329 = vmatprep.subr.mxu0 0.0
    %1330 = vmatpush1.msra.mxu0 0.0
    %1331 = vmatprep.subr.mxu0 0.0
    %1332 = vmatpush1.msra.mxu0 0.0
    %1333 = vmatprep.subr.mxu0 0.0
    %1334 = vmatpush1.msra.mxu0 0.0
    %1335 = vmatprep.subr.mxu0 0.0
    %1336 = vmatpush1.msra.mxu0 0.0
    %1337 = vmatprep.subr.mxu0 0.0
    %1338 = vmatpush1.msra.mxu0 0.0
    %1339 = vmatprep.subr.mxu0 0.0
    %1340 = vmatpush1.msra.mxu0 0.0
    %1341 = vmatprep.subr.mxu0 0.0
    %1342 = vmatpush1.msra.mxu0 0.0
    %1343 = vmatprep.subr.mxu0 0.0
    %1344 = vmatpush1.msra.mxu0 0.0
    %1345 = vmatprep.subr.mxu0 0.0
    %1346 = vmatpush1.msra.mxu0 0.0
    %1347 = vmatprep.subr.mxu0 0.0
    %1348 = vmatpush1.msra.mxu0 0.0
    %1349 = vmatprep.subr.mxu0 0.0
    %1350 = vmatpush1.msra.mxu0 0.0
    %1351 = vmatprep.subr.mxu0 0.0
    %1352 = vmatpush1.msra.mxu0 0.0
    %1353 = vmatprep.subr.mxu0 0.0
    %1354 = vmatpush1.msra.mxu0 0.0
    %1355 = vmatprep.subr.mxu0 0.0
    %1356 = vmatpush1.msra.mxu0 0.0
    %1357 = vmatprep.subr.mxu0 0.0
    %1358 = vmatpush1.msra.mxu0 0.0
    %1359 = vmatprep.subr.mxu0 0.0
    %1360 = vmatpush1.msra.mxu0 0.0
    %1361 = vmatprep.subr.mxu0 0.0
    %1362 = vmatpush1.msra.mxu0 0.0
    %1363 = vmatprep.subr.mxu0 0.0
    %1364 = vmatpush1.msra.mxu0 0.0
    %1365 = vmatprep.subr.mxu0 0.0
    %1366 = vmatpush1.msra.mxu0 0.0
    %1367 = vmatprep.mubr.f32.mxu0 0.0
    %1368 = vmatmul.mubr.f32.gmra.mrb[0].mxu0 %v1301
    %v1369 = vpop.f32.mrb[0].mxu0
    %v1370 = vadd.f32 0.0, %v1369
    %v1371 = vpop.f32.mrb[0].mxu0
    %1372 = vdwg.mxu0
    %1374 = vrot.lane.b32.xlu0 %v282, 64
    %v1375 = vpop.permute.xlu0 %1374
    %v1378 = vsel %vm899, %v985, 0
    %1380 = vmatprep.subr.mxu0 0.0
    %1381 = vmatpush1.msra.mxu0 %v1375
    %1382 = vmatprep.subr.mxu0 0.0
    %1383 = vmatpush1.msra.mxu0 0.0
    %1384 = vmatprep.subr.mxu0 0.0
    %1385 = vmatpush1.msra.mxu0 0.0
    %1386 = vmatprep.subr.mxu0 0.0
    %1387 = vmatpush1.msra.mxu0 0.0
    %1388 = vmatprep.subr.mxu0 0.0
    %1389 = vmatpush1.msra.mxu0 0.0
    %1390 = vmatprep.subr.mxu0 0.0
    %1391 = vmatpush1.msra.mxu0 0.0
    %1392 = vmatprep.subr.mxu0 0.0
    %1393 = vmatpush1.msra.mxu0 0.0
    %1394 = vmatprep.subr.mxu0 0.0
    %1395 = vmatpush1.msra.mxu0 0.0
    %1396 = vmatprep.subr.mxu0 0.0
    %1397 = vmatpush1.msra.mxu0 0.0
    %1398 = vmatprep.subr.mxu0 0.0
    %1399 = vmatpush1.msra.mxu0 0.0
    %1400 = vmatprep.subr.mxu0 0.0
    %1401 = vmatpush1.msra.mxu0 0.0
    %1402 = vmatprep.subr.mxu0 0.0
    %1403 = vmatpush1.msra.mxu0 0.0
    %1404 = vmatprep.subr.mxu0 0.0
    %1405 = vmatpush1.msra.mxu0 0.0
    %1406 = vmatprep.subr.mxu0 0.0
    %1407 = vmatpush1.msra.mxu0 0.0
    %1408 = vmatprep.subr.mxu0 0.0
    %1409 = vmatpush1.msra.mxu0 0.0
    %1410 = vmatprep.subr.mxu0 0.0
    %1411 = vmatpush1.msra.mxu0 0.0
    %1412 = vmatprep.subr.mxu0 0.0
    %1413 = vmatpush1.msra.mxu0 0.0
    %1414 = vmatprep.subr.mxu0 0.0
    %1415 = vmatpush1.msra.mxu0 0.0
    %1416 = vmatprep.subr.mxu0 0.0
    %1417 = vmatpush1.msra.mxu0 0.0
    %1418 = vmatprep.subr.mxu0 0.0
    %1419 = vmatpush1.msra.mxu0 0.0
    %1420 = vmatprep.subr.mxu0 0.0
    %1421 = vmatpush1.msra.mxu0 0.0
    %1422 = vmatprep.subr.mxu0 0.0
    %1423 = vmatpush1.msra.mxu0 0.0
    %1424 = vmatprep.subr.mxu0 0.0
    %1425 = vmatpush1.msra.mxu0 0.0
    %1426 = vmatprep.subr.mxu0 0.0
    %1427 = vmatpush1.msra.mxu0 0.0
    %1428 = vmatprep.subr.mxu0 0.0
    %1429 = vmatpush1.msra.mxu0 0.0
    %1430 = vmatprep.subr.mxu0 0.0
    %1431 = vmatpush1.msra.mxu0 0.0
    %1432 = vmatprep.subr.mxu0 0.0
    %1433 = vmatpush1.msra.mxu0 0.0
    %1434 = vmatprep.subr.mxu0 0.0
    %1435 = vmatpush1.msra.mxu0 0.0
    %1436 = vmatprep.subr.mxu0 0.0
    %1437 = vmatpush1.msra.mxu0 0.0
    %1438 = vmatprep.subr.mxu0 0.0
    %1439 = vmatpush1.msra.mxu0 0.0
    %1440 = vmatprep.subr.mxu0 0.0
    %1441 = vmatpush1.msra.mxu0 0.0
    %1442 = vmatprep.subr.mxu0 0.0
    %1443 = vmatpush1.msra.mxu0 0.0
    %1444 = vmatprep.mubr.f32.mxu0 0.0
    %1445 = vmatmul.mubr.f32.gmra.mrb[0].mxu0 %v1378
    %v1446 = vpop.f32.mrb[0].mxu0
    %v1447 = vadd.f32 0.0, %v1446
    %v1448 = vpop.f32.mrb[0].mxu0
    %1449 = vdwg.mxu0
    %1451 = vrot.lane.b32.xlu0 %v283, 64
    %v1452 = vpop.permute.xlu0 %1451
    %v1455 = vsel %vm899, %v986, 0
    %1457 = vmatprep.subr.mxu0 0.0
    %1458 = vmatpush1.msra.mxu0 %v1452
    %1459 = vmatprep.subr.mxu0 0.0
    %1460 = vmatpush1.msra.mxu0 0.0
    %1461 = vmatprep.subr.mxu0 0.0
    %1462 = vmatpush1.msra.mxu0 0.0
    %1463 = vmatprep.subr.mxu0 0.0
    %1464 = vmatpush1.msra.mxu0 0.0
    %1465 = vmatprep.subr.mxu0 0.0
    %1466 = vmatpush1.msra.mxu0 0.0
    %1467 = vmatprep.subr.mxu0 0.0
    %1468 = vmatpush1.msra.mxu0 0.0
    %1469 = vmatprep.subr.mxu0 0.0
    %1470 = vmatpush1.msra.mxu0 0.0
    %1471 = vmatprep.subr.mxu0 0.0
    %1472 = vmatpush1.msra.mxu0 0.0
    %1473 = vmatprep.subr.mxu0 0.0
    %1474 = vmatpush1.msra.mxu0 0.0
    %1475 = vmatprep.subr.mxu0 0.0
    %1476 = vmatpush1.msra.mxu0 0.0
    %1477 = vmatprep.subr.mxu0 0.0
    %1478 = vmatpush1.msra.mxu0 0.0
    %1479 = vmatprep.subr.mxu0 0.0
    %1480 = vmatpush1.msra.mxu0 0.0
    %1481 = vmatprep.subr.mxu0 0.0
    %1482 = vmatpush1.msra.mxu0 0.0
    %1483 = vmatprep.subr.mxu0 0.0
    %1484 = vmatpush1.msra.mxu0 0.0
    %1485 = vmatprep.subr.mxu0 0.0
    %1486 = vmatpush1.msra.mxu0 0.0
    %1487 = vmatprep.subr.mxu0 0.0
    %1488 = vmatpush1.msra.mxu0 0.0
    %1489 = vmatprep.subr.mxu0 0.0
    %1490 = vmatpush1.msra.mxu0 0.0
    %1491 = vmatprep.subr.mxu0 0.0
    %1492 = vmatpush1.msra.mxu0 0.0
    %1493 = vmatprep.subr.mxu0 0.0
    %1494 = vmatpush1.msra.mxu0 0.0
    %1495 = vmatprep.subr.mxu0 0.0
    %1496 = vmatpush1.msra.mxu0 0.0
    %1497 = vmatprep.subr.mxu0 0.0
    %1498 = vmatpush1.msra.mxu0 0.0
    %1499 = vmatprep.subr.mxu0 0.0
    %1500 = vmatpush1.msra.mxu0 0.0
    %1501 = vmatprep.subr.mxu0 0.0
    %1502 = vmatpush1.msra.mxu0 0.0
    %1503 = vmatprep.subr.mxu0 0.0
    %1504 = vmatpush1.msra.mxu0 0.0
    %1505 = vmatprep.subr.mxu0 0.0
    %1506 = vmatpush1.msra.mxu0 0.0
    %1507 = vmatprep.subr.mxu0 0.0
    %1508 = vmatpush1.msra.mxu0 0.0
    %1509 = vmatprep.subr.mxu0 0.0
    %1510 = vmatpush1.msra.mxu0 0.0
    %1511 = vmatprep.subr.mxu0 0.0
    %1512 = vmatpush1.msra.mxu0 0.0
    %1513 = vmatprep.subr.mxu0 0.0
    %1514 = vmatpush1.msra.mxu0 0.0
    %1515 = vmatprep.subr.mxu0 0.0
    %1516 = vmatpush1.msra.mxu0 0.0
    %1517 = vmatprep.subr.mxu0 0.0
    %1518 = vmatpush1.msra.mxu0 0.0
    %1519 = vmatprep.subr.mxu0 0.0
    %1520 = vmatpush1.msra.mxu0 0.0
    %1521 = vmatprep.mubr.f32.mxu0 0.0
    %1522 = vmatmul.mubr.f32.gmra.mrb[0].mxu0 %v1455
    %v1523 = vpop.f32.mrb[0].mxu0
    %v1524 = vadd.f32 0.0, %v1523
    %v1525 = vpop.f32.mrb[0].mxu0
    %1526 = vdwg.mxu0
    %1528 = vrot.lane.b32.xlu0 %v284, 64
    %v1529 = vpop.permute.xlu0 %1528
    %v1532 = vsel %vm899, %v987, 0
    %1534 = vmatprep.subr.mxu0 0.0
    %1535 = vmatpush1.msra.mxu0 %v1529
    %1536 = vmatprep.subr.mxu0 0.0
    %1537 = vmatpush1.msra.mxu0 0.0
    %1538 = vmatprep.subr.mxu0 0.0
    %1539 = vmatpush1.msra.mxu0 0.0
    %1540 = vmatprep.subr.mxu0 0.0
    %1541 = vmatpush1.msra.mxu0 0.0
    %1542 = vmatprep.subr.mxu0 0.0
    %1543 = vmatpush1.msra.mxu0 0.0
    %1544 = vmatprep.subr.mxu0 0.0
    %1545 = vmatpush1.msra.mxu0 0.0
    %1546 = vmatprep.subr.mxu0 0.0
    %1547 = vmatpush1.msra.mxu0 0.0
    %1548 = vmatprep.subr.mxu0 0.0
    %1549 = vmatpush1.msra.mxu0 0.0
    %1550 = vmatprep.subr.mxu0 0.0
    %1551 = vmatpush1.msra.mxu0 0.0
    %1552 = vmatprep.subr.mxu0 0.0
    %1553 = vmatpush1.msra.mxu0 0.0
    %1554 = vmatprep.subr.mxu0 0.0
    %1555 = vmatpush1.msra.mxu0 0.0
    %1556 = vmatprep.subr.mxu0 0.0
    %1557 = vmatpush1.msra.mxu0 0.0
    %1558 = vmatprep.subr.mxu0 0.0
    %1559 = vmatpush1.msra.mxu0 0.0
    %1560 = vmatprep.subr.mxu0 0.0
    %1561 = vmatpush1.msra.mxu0 0.0
    %1562 = vmatprep.subr.mxu0 0.0
    %1563 = vmatpush1.msra.mxu0 0.0
    %1564 = vmatprep.subr.mxu0 0.0
    %1565 = vmatpush1.msra.mxu0 0.0
    %1566 = vmatprep.subr.mxu0 0.0
    %1567 = vmatpush1.msra.mxu0 0.0
    %1568 = vmatprep.subr.mxu0 0.0
    %1569 = vmatpush1.msra.mxu0 0.0
    %1570 = vmatprep.subr.mxu0 0.0
    %1571 = vmatpush1.msra.mxu0 0.0
    %1572 = vmatprep.subr.mxu0 0.0
    %1573 = vmatpush1.msra.mxu0 0.0
    %1574 = vmatprep.subr.mxu0 0.0
    %1575 = vmatpush1.msra.mxu0 0.0
    %1576 = vmatprep.subr.mxu0 0.0
    %1577 = vmatpush1.msra.mxu0 0.0
    %1578 = vmatprep.subr.mxu0 0.0
    %1579 = vmatpush1.msra.mxu0 0.0
    %1580 = vmatprep.subr.mxu0 0.0
    %1581 = vmatpush1.msra.mxu0 0.0
    %1582 = vmatprep.subr.mxu0 0.0
    %1583 = vmatpush1.msra.mxu0 0.0
    %1584 = vmatprep.subr.mxu0 0.0
    %1585 = vmatpush1.msra.mxu0 0.0
    %1586 = vmatprep.subr.mxu0 0.0
    %1587 = vmatpush1.msra.mxu0 0.0
    %1588 = vmatprep.subr.mxu0 0.0
    %1589 = vmatpush1.msra.mxu0 0.0
    %1590 = vmatprep.subr.mxu0 0.0
    %1591 = vmatpush1.msra.mxu0 0.0
    %1592 = vmatprep.subr.mxu0 0.0
    %1593 = vmatpush1.msra.mxu0 0.0
    %1594 = vmatprep.subr.mxu0 0.0
    %1595 = vmatpush1.msra.mxu0 0.0
    %1596 = vmatprep.subr.mxu0 0.0
    %1597 = vmatpush1.msra.mxu0 0.0
    %1598 = vmatprep.mubr.f32.mxu0 0.0
    %1599 = vmatmul.mubr.f32.gmra.mrb[0].mxu0 %v1532
    %v1600 = vpop.f32.mrb[0].mxu0
    %v1601 = vadd.f32 0.0, %v1600
    %v1602 = vpop.f32.mrb[0].mxu0
    %1603 = vdwg.mxu0
    %v1604 = vadd.f32 %v1062, %v1139
    %v1605 = vadd.f32 %v1370, %v1447
    %v1606 = vadd.f32 %v1604, %v1216
    %v1607 = vadd.f32 %v1605, %v1524
    %v1608 = vadd.f32 %v1606, %v1293
    %v1609 = vadd.f32 %v1607, %v1601
    %v1610 = vld [vmem:[%s7] sm:$0xff]
    %v1611 = vld [vmem:[%s7 + $0x8] sm:$0xff]
    %v1612 = vld [vmem:[%s7 + $0x10] sm:$0xff]
    %v1613 = vld [vmem:[%s7 + $0x18] sm:$0xff]
    %v1614 = vld [vmem:[%s8] sm:$0x1]
    %v1616 = vlaneseq
    %v1617 = vshrl.u32 %v1616, 7
    %v1618 = vsub.s32 0, %v1617
    %v1619 = vrot.slane %v1614, %v1618
    %v1622 = vsel %vm89, %v1608, 0
    %v1625 = vsel %vm89, %v1609, 0
    %1627 = vmatprep.subr.mxu0 0.0
    %1628 = vmatpush1.msra.mxu0 %v1610
    %1629 = vmatprep.subr.mxu0 0.0
    %1630 = vmatpush1.msra.mxu0 %v1611
    %1631 = vmatprep.subr.mxu0 0.0
    %1632 = vmatpush1.msra.mxu0 %v1612
    %1633 = vmatprep.subr.mxu0 0.0
    %1634 = vmatpush1.msra.mxu0 %v1613
    %1635 = vmatprep.subr.mxu0 0.0
    %1636 = vmatpush1.msra.mxu0 0.0
    %1637 = vmatprep.subr.mxu0 0.0
    %1638 = vmatpush1.msra.mxu0 0.0
    %1639 = vmatprep.subr.mxu0 0.0
    %1640 = vmatpush1.msra.mxu0 0.0
    %1641 = vmatprep.subr.mxu0 0.0
    %1642 = vmatpush1.msra.mxu0 0.0
    %1643 = vmatprep.subr.mxu0 0.0
    %1644 = vmatpush1.msra.mxu0 0.0
    %1645 = vmatprep.subr.mxu0 0.0
    %1646 = vmatpush1.msra.mxu0 0.0
    %1647 = vmatprep.subr.mxu0 0.0
    %1648 = vmatpush1.msra.mxu0 0.0
    %1649 = vmatprep.subr.mxu0 0.0
    %1650 = vmatpush1.msra.mxu0 0.0
    %1651 = vmatprep.subr.mxu0 0.0
    %1652 = vmatpush1.msra.mxu0 0.0
    %1653 = vmatprep.subr.mxu0 0.0
    %1654 = vmatpush1.msra.mxu0 0.0
    %1655 = vmatprep.subr.mxu0 0.0
    %1656 = vmatpush1.msra.mxu0 0.0
    %1657 = vmatprep.subr.mxu0 0.0
    %1658 = vmatpush1.msra.mxu0 0.0
    %1659 = vmatprep.subr.mxu0 0.0
    %1660 = vmatpush1.msra.mxu0 0.0
    %1661 = vmatprep.subr.mxu0 0.0
    %1662 = vmatpush1.msra.mxu0 0.0
    %1663 = vmatprep.subr.mxu0 0.0
    %1664 = vmatpush1.msra.mxu0 0.0
    %1665 = vmatprep.subr.mxu0 0.0
    %1666 = vmatpush1.msra.mxu0 0.0
    %1667 = vmatprep.subr.mxu0 0.0
    %1668 = vmatpush1.msra.mxu0 0.0
    %1669 = vmatprep.subr.mxu0 0.0
    %1670 = vmatpush1.msra.mxu0 0.0
    %1671 = vmatprep.subr.mxu0 0.0
    %1672 = vmatpush1.msra.mxu0 0.0
    %1673 = vmatprep.subr.mxu0 0.0
    %1674 = vmatpush1.msra.mxu0 0.0
    %1675 = vmatprep.subr.mxu0 0.0
    %1676 = vmatpush1.msra.mxu0 0.0
    %1677 = vmatprep.subr.mxu0 0.0
    %1678 = vmatpush1.msra.mxu0 0.0
    %1679 = vmatprep.subr.mxu0 0.0
    %1680 = vmatpush1.msra.mxu0 0.0
    %1681 = vmatprep.subr.mxu0 0.0
    %1682 = vmatpush1.msra.mxu0 0.0
    %1683 = vmatprep.subr.mxu0 0.0
    %1684 = vmatpush1.msra.mxu0 0.0
    %1685 = vmatprep.subr.mxu0 0.0
    %1686 = vmatpush1.msra.mxu0 0.0
    %1687 = vmatprep.subr.mxu0 0.0
    %1688 = vmatpush1.msra.mxu0 0.0
    %1689 = vmatprep.subr.mxu0 0.0
    %1690 = vmatpush1.msra.mxu0 0.0
    %1691 = vmatprep.mubr.f32.mxu0 0.0
    %1692 = vmatmul.mubr.f32.gmra.mrb[0].mxu0 %v1622
    %v1693 = vpop.f32.mrb[0].mxu0
    %v1694 = vadd.f32 %v1619, %v1693
    %v1695 = vpop.f32.mrb[0].mxu0
    %1696 = vmatprep.mubr.f32.mxu0 0.0
    %1697 = vmatmul.mubr.f32.gmra.mrb[0].mxu0 %v1625
    %v1698 = vpop.f32.mrb[0].mxu0
    %v1699 = vadd.f32 %v1619, %v1698
    %v1700 = vpop.f32.mrb[0].mxu0
    %1701 = vdwg.mxu0
    %v1702 = vadd.f32 %v79, %v1694
    %v1703 = vadd.f32 %v80, %v1699
    %v1704 = vld [vmem:[%s9] sm:$0x1]
    %v1705 = vld [vmem:[%s10] sm:$0x1]
    %v1706 = vsel %vm89, %v1702, 0.0
    %1707 = vadd.xlane.f32.xlu0 %v1706
    %v1708 = vpop.xlane.xlu0 %1707
    %v1709 = vsel %vm89, %v1703, 0.0
    %1710 = vadd.xlane.f32.xlu0 %v1709
    %v1711 = vpop.xlane.xlu0 %1710
    %v1712 = vmul.f32 %v1708, %v96
    %v1713 = vmul.f32 %v1711, %v96
    %v1714 = vsub.f32 %v1702, %v1712
    %v1715 = vsub.f32 %v1703, %v1713
    %v1716 = vmul.f32 %v1714, %v1714
    %v1717 = vmul.f32 %v1715, %v1715
    %v1718 = vsel %vm89, %v1716, 0.0
    %1719 = vadd.xlane.f32.xlu0 %v1718
    %v1720 = vpop.xlane.xlu0 %1719
    %v1721 = vsel %vm89, %v1717, 0.0
    %1722 = vadd.xlane.f32.xlu0 %v1721
    %v1723 = vpop.xlane.xlu0 %1722
    %v1724 = vmul.f32 %v1720, %v96
    %v1725 = vmul.f32 %v1723, %v96
    %v1726 = vadd.f32 %v1724, 1e-05
    %v1727 = vadd.f32 %v1725, 1e-05
    %v1728 = vrsqrt.pop %v1726
    %v1729 = vrsqrt.pop %v1727
    %v1730 = vmul.f32 %v1714, %v1728
    %v1731 = vmul.f32 %v1715, %v1729
    %v1733 = vlaneseq
    %v1734 = vshrl.u32 %v1733, 7
    %v1735 = vsub.s32 0, %v1734
    %v1736 = vrot.slane %v1704, %v1735
    %v1738 = vmul.f32 %v1730, %v1736
    %v1739 = vmul.f32 %v1731, %v1736
    %v1741 = vlaneseq
    %v1742 = vshrl.u32 %v1741, 7
    %v1743 = vsub.s32 0, %v1742
    %v1744 = vrot.slane %v1705, %v1743
    %v1746 = vadd.f32 %v1738, %v1744
    %v1747 = vadd.f32 %v1739, %v1744
    %v1748 = vld [vmem:[%s11] sm:$0xff]
    %v1749 = vld [vmem:[%s11 + $0x8] sm:$0xff]
    %v1750 = vld [vmem:[%s11 + $0x10] sm:$0xff]
    %v1751 = vld [vmem:[%s11 + $0x18] sm:$0xff]
    %v1752 = vld [vmem:[%s12] sm:$0x1]
    %v1754 = vlaneseq
    %v1755 = vshrl.u32 %v1754, 7
    %v1756 = vsub.s32 0, %v1755
    %v1757 = vrot.slane %v1752, %v1756
    %v1760 = vsel %vm89, %v1746, 0
    %v1763 = vsel %vm89, %v1747, 0
    %1765 = vmatprep.subr.mxu0 0.0
    %1766 = vmatpush1.msra.mxu0 %v1748
    %1767 = vmatprep.subr.mxu0 0.0
    %1768 = vmatpush1.msra.mxu0 %v1749
    %1769 = vmatprep.subr.mxu0 0.0
    %1770 = vmatpush1.msra.mxu0 %v1750
    %1771 = vmatprep.subr.mxu0 0.0
    %1772 = vmatpush1.msra.mxu0 %v1751
    %1773 = vmatprep.subr.mxu0 0.0
    %1774 = vmatpush1.msra.mxu0 0.0
    %1775 = vmatprep.subr.mxu0 0.0
    %1776 = vmatpush1.msra.mxu0 0.0
    %1777 = vmatprep.subr.mxu0 0.0
    %1778 = vmatpush1.msra.mxu0 0.0
    %1779 = vmatprep.subr.mxu0 0.0
    %1780 = vmatpush1.msra.mxu0 0.0
    %1781 = vmatprep.subr.mxu0 0.0
    %1782 = vmatpush1.msra.mxu0 0.0
    %1783 = vmatprep.subr.mxu0 0.0
    %1784 = vmatpush1.msra.mxu0 0.0
    %1785 = vmatprep.subr.mxu0 0.0
    %1786 = vmatpush1.msra.mxu0 0.0
    %1787 = vmatprep.subr.mxu0 0.0
    %1788 = vmatpush1.msra.mxu0 0.0
    %1789 = vmatprep.subr.mxu0 0.0
    %1790 = vmatpush1.msra.mxu0 0.0
    %1791 = vmatprep.subr.mxu0 0.0
    %1792 = vmatpush1.msra.mxu0 0.0
    %1793 = vmatprep.subr.mxu0 0.0
    %1794 = vmatpush1.msra.mxu0 0.0
    %1795 = vmatprep.subr.mxu0 0.0
    %1796 = vmatpush1.msra.mxu0 0.0
    %1797 = vmatprep.subr.mxu0 0.0
    %1798 = vmatpush1.msra.mxu0 0.0
    %1799 = vmatprep.subr.mxu0 0.0
    %1800 = vmatpush1.msra.mxu0 0.0
    %1801 = vmatprep.subr.mxu0 0.0
    %1802 = vmatpush1.msra.mxu0 0.0
    %1803 = vmatprep.subr.mxu0 0.0
    %1804 = vmatpush1.msra.mxu0 0.0
    %1805 = vmatprep.subr.mxu0 0.0
    %1806 = vmatpush1.msra.mxu0 0.0
    %1807 = vmatprep.subr.mxu0 0.0
    %1808 = vmatpush1.msra.mxu0 0.0
    %1809 = vmatprep.subr.mxu0 0.0
    %1810 = vmatpush1.msra.mxu0 0.0
    %1811 = vmatprep.subr.mxu0 0.0
    %1812 = vmatpush1.msra.mxu0 0.0
    %1813 = vmatprep.subr.mxu0 0.0
    %1814 = vmatpush1.msra.mxu0 0.0
    %1815 = vmatprep.subr.mxu0 0.0
    %1816 = vmatpush1.msra.mxu0 0.0
    %1817 = vmatprep.subr.mxu0 0.0
    %1818 = vmatpush1.msra.mxu0 0.0
    %1819 = vmatprep.subr.mxu0 0.0
    %1820 = vmatpush1.msra.mxu0 0.0
    %1821 = vmatprep.subr.mxu0 0.0
    %1822 = vmatpush1.msra.mxu0 0.0
    %1823 = vmatprep.subr.mxu0 0.0
    %1824 = vmatpush1.msra.mxu0 0.0
    %1825 = vmatprep.subr.mxu0 0.0
    %1826 = vmatpush1.msra.mxu0 0.0
    %1827 = vmatprep.subr.mxu0 0.0
    %1828 = vmatpush1.msra.mxu0 0.0
    %1829 = vmatprep.mubr.f32.mxu0 0.0
    %1830 = vmatmul.mubr.f32.gmra.mrb[0].mxu0 %v1760
    %v1831 = vpop.f32.mrb[0].mxu0
    %v1832 = vadd.f32 %v1757, %v1831
    %v1833 = vpop.f32.mrb[0].mxu0
    %1834 = vmatprep.mubr.f32.mxu0 0.0
    %1835 = vmatmul.mubr.f32.gmra.mrb[0].mxu0 %v1763
    %v1836 = vpop.f32.mrb[0].mxu0
    %v1837 = vadd.f32 %v1757, %v1836
    %v1838 = vpop.f32.mrb[0].mxu0
    %1839 = vdwg.mxu0
    %v1840 = vmul.f32 %v1832, 0.5
    %v1841 = vmul.f32 %v1837, 0.5
    %v1842 = vmul.f32 %v1832, 0.70710677
    %v1843 = vmul.f32 %v1837, 0.70710677
    %v1844 = vand.u32 2147483647, %v1842
    %v1845 = vand.u32 2147483647, %v1843
    %v1846 = vmul.f32 %v1844, 0.3275911
    %v1847 = vmul.f32 %v1845, 0.3275911
    %v1848 = vadd.f32 %v1846, 1.0
    %v1849 = vadd.f32 %v1847, 1.0
    %v1850 = vrcp.pop %v1848
    %v1851 = vmul.f32 1.0, %v1850
    %v1852 = vrcp.pop %v1849
    %v1853 = vmul.f32 1.0, %v1852
    %v1854 = vmul.f32 %v1851, 1.0614054
    %v1855 = vmul.f32 %v1853, 1.0614054
    %v1856 = vadd.f32 %v1854, -1.4531521
    %v1857 = vadd.f32 %v1855, -1.4531521
    %v1858 = vmul.f32 %v1856, %v1851
    %v1859 = vmul.f32 %v1857, %v1853
    %v1860 = vadd.f32 %v1858, 1.4214138
    %v1861 = vadd.f32 %v1859, 1.4214138
    %v1862 = vmul.f32 %v1860, %v1851
    %v1863 = vmul.f32 %v1861, %v1853
    %v1864 = vadd.f32 %v1862, -0.28449672
    %v1865 = vadd.f32 %v1863, -0.28449672
    %v1866 = vmul.f32 %v1864, %v1851
    %v1867 = vmul.f32 %v1865, %v1853
    %v1868 = vadd.f32 %v1866, 0.2548296
    %v1869 = vadd.f32 %v1867, 0.2548296
    %v1870 = vmul.f32 %v1868, %v1851
    %v1871 = vmul.f32 %v1869, %v1853
    %v1872 = vsub.f32 0.0, %v1844
    %v1873 = vsub.f32 0.0, %v1845
    %v1874 = vmul.f32 %v1872, %v1844
    %v1875 = vmul.f32 %v1873, %v1845
    %v1876 = vmul.f32 %v1874, 1.442695
    %v1877 = vpow.pop %v1876
    %v1878 = vmul.f32 %v1875, 1.442695
    %v1879 = vpow.pop %v1878
    %v1880 = vmul.f32 %v1870, %v1877
    %v1881 = vmul.f32 %v1871, %v1879
    %v1882 = vsub.f32 1.0, %v1880
    %v1883 = vsub.f32 1.0, %v1881
    %vm1884 = vcmp.ge.f32.partialorder %v1842, 0.0
    %vm1885 = vcmp.ge.f32.partialorder %v1843, 0.0
    %v1886 = vsub.f32 0.0, %v1882
    %v1887 = vsub.f32 0.0, %v1883
    %v1888 = vsel %vm1884, %v1882, %v1886
    %v1889 = vsel %vm1885, %v1883, %v1887
    %v1890 = vadd.f32 %v1888, 1.0
    %v1891 = vadd.f32 %v1889, 1.0
    %v1892 = vmul.f32 %v1840, %v1890
    %v1893 = vmul.f32 %v1841, %v1891
    %v1894 = vld [vmem:[%s13] sm:$0xff]
    %v1895 = vld [vmem:[%s13 + $0x8] sm:$0xff]
    %v1896 = vld [vmem:[%s13 + $0x10] sm:$0xff]
    %v1897 = vld [vmem:[%s13 + $0x18] sm:$0xff]
    %v1898 = vld [vmem:[%s13 + $0x20] sm:$0xff]
    %v1899 = vld [vmem:[%s13 + $0x28] sm:$0xff]
    %v1900 = vld [vmem:[%s13 + $0x30] sm:$0xff]
    %v1901 = vld [vmem:[%s13 + $0x38] sm:$0xff]
    %v1902 = vld [vmem:[%s14] sm:$0x1]
    %v1904 = vlaneseq
    %v1905 = vshrl.u32 %v1904, 7
    %v1906 = vsub.s32 0, %v1905
    %v1907 = vrot.slane %v1902, %v1906
    %vm1909 = vcmask 523264
    %v1911 = vsel %vm1909, %v1892, 0
    %v1914 = vsel %vm1909, %v1893, 0
    %1916 = vmatprep.subr.mxu0 0.0
    %1917 = vmatpush1.msra.mxu0 %v1894
    %1918 = vmatprep.subr.mxu0 0.0
    %1919 = vmatpush1.msra.mxu0 %v1895
    %1920 = vmatprep.subr.mxu0 0.0
    %1921 = vmatpush1.msra.mxu0 %v1896
    %1922 = vmatprep.subr.mxu0 0.0
    %1923 = vmatpush1.msra.mxu0 %v1897
    %1924 = vmatprep.subr.mxu0 0.0
    %1925 = vmatpush1.msra.mxu0 %v1898
    %1926 = vmatprep.subr.mxu0 0.0
    %1927 = vmatpush1.msra.mxu0 %v1899
    %1928 = vmatprep.subr.mxu0 0.0
    %1929 = vmatpush1.msra.mxu0 %v1900
    %1930 = vmatprep.subr.mxu0 0.0
    %1931 = vmatpush1.msra.mxu0 %v1901
    %1932 = vmatprep.subr.mxu0 0.0
    %1933 = vmatpush1.msra.mxu0 0.0
    %1934 = vmatprep.subr.mxu0 0.0
    %1935 = vmatpush1.msra.mxu0 0.0
    %1936 = vmatprep.subr.mxu0 0.0
    %1937 = vmatpush1.msra.mxu0 0.0
    %1938 = vmatprep.subr.mxu0 0.0
    %1939 = vmatpush1.msra.mxu0 0.0
    %1940 = vmatprep.subr.mxu0 0.0
    %1941 = vmatpush1.msra.mxu0 0.0
    %1942 = vmatprep.subr.mxu0 0.0
    %1943 = vmatpush1.msra.mxu0 0.0
    %1944 = vmatprep.subr.mxu0 0.0
    %1945 = vmatpush1.msra.mxu0 0.0
    %1946 = vmatprep.subr.mxu0 0.0
    %1947 = vmatpush1.msra.mxu0 0.0
    %1948 = vmatprep.subr.mxu0 0.0
    %1949 = vmatpush1.msra.mxu0 0.0
    %1950 = vmatprep.subr.mxu0 0.0
    %1951 = vmatpush1.msra.mxu0 0.0
    %1952 = vmatprep.subr.mxu0 0.0
    %1953 = vmatpush1.msra.mxu0 0.0
    %1954 = vmatprep.subr.mxu0 0.0
    %1955 = vmatpush1.msra.mxu0 0.0
    %1956 = vmatprep.subr.mxu0 0.0
    %1957 = vmatpush1.msra.mxu0 0.0
    %1958 = vmatprep.subr.mxu0 0.0
    %1959 = vmatpush1.msra.mxu0 0.0
    %1960 = vmatprep.subr.mxu0 0.0
    %1961 = vmatpush1.msra.mxu0 0.0
    %1962 = vmatprep.subr.mxu0 0.0
    %1963 = vmatpush1.msra.mxu0 0.0
    %1964 = vmatprep.subr.mxu0 0.0
    %1965 = vmatpush1.msra.mxu0 0.0
    %1966 = vmatprep.subr.mxu0 0.0
    %1967 = vmatpush1.msra.mxu0 0.0
    %1968 = vmatprep.subr.mxu0 0.0
    %1969 = vmatpush1.msra.mxu0 0.0
    %1970 = vmatprep.subr.mxu0 0.0
    %1971 = vmatpush1.msra.mxu0 0.0
    %1972 = vmatprep.subr.mxu0 0.0
    %1973 = vmatpush1.msra.mxu0 0.0
    %1974 = vmatprep.subr.mxu0 0.0
    %1975 = vmatpush1.msra.mxu0 0.0
    %1976 = vmatprep.subr.mxu0 0.0
    %1977 = vmatpush1.msra.mxu0 0.0
    %1978 = vmatprep.subr.mxu0 0.0
    %1979 = vmatpush1.msra.mxu0 0.0
    %1980 = vmatprep.mubr.f32.mxu0 0.0
    %1981 = vmatmul.mubr.f32.gmra.mrb[0].mxu0 %v1911
    %v1982 = vpop.f32.mrb[0].mxu0
    %v1983 = vadd.f32 %v1907, %v1982
    %v1984 = vpop.f32.mrb[0].mxu0
    %1985 = vmatprep.mubr.f32.mxu0 0.0
    %1986 = vmatmul.mubr.f32.gmra.mrb[0].mxu0 %v1914
    %v1987 = vpop.f32.mrb[0].mxu0
    %v1988 = vadd.f32 %v1907, %v1987
    %v1989 = vpop.f32.mrb[0].mxu0
    %1990 = vdwg.mxu0
    %v1991 = vadd.f32 %v1702, %v1983
    %v1992 = vadd.f32 %v1703, %v1988
    %1993 = vst.msk [vmem:[#allocation7] sm:$0xff] %vm89, %v1991
    %1994 = vst.msk [vmem:[#allocation7 + $0x8] sm:$0xff] %vm89, %v1992
    // Predicated region
    $region70: #{minicpm_whisper_encoder_layer.1} parent=1 // pred_check
      _
    $region71: #{minicpm_whisper_encoder_layer.1} parent=1 // pred_check_branch
      %1996 = sbr.rel (0) target = $region73
    $region72: #{minicpm_whisper_encoder_layer.1} parent=1 // pred_region
      %s1998 = ssub.s32 256, 256
      %1999 = vsyncadd [#allocation4], %s1998
      %s2000 = sshll.u32 [#allocation7], 4
      %s2001 = int_to_ptr.vmem [resolvable:$true] %s2000
      %2006 = dma.vmem_to_hbm [thread:$0]  %s2001, 256, %s15, [#allocation4], 128, 128, 8
    $region73: #{minicpm_whisper_encoder_layer.1} parent=1 // pred_fallthru
      _
    // Predicated region
    $region74: #{minicpm_whisper_encoder_layer.1} parent=1 // pred_check
      _
    $region75: #{minicpm_whisper_encoder_layer.1} parent=1 // pred_check_branch
      %2008 = sbr.rel (0) target = $region77
    $region76: #{minicpm_whisper_encoder_layer.1} parent=1 // pred_region
      %2009 = dma.done [#allocation4], 256
    $region77: #{minicpm_whisper_encoder_layer.1} parent=1 // pred_fallthru
      _
    %2010 = vsyncpa [#allocation3], 1
    %2011 = vsyncpa [#allocation6], 1
    %2012 = vsyncpa [#allocation4], 1

</llo_original>
